<compile_context>
chip_gen: v7x
topology: tpu7x:2x2x1
jax: 0.10.0
libtpu: 0.0.40
codegen_flags: <defaults>
</compile_context>

<pallas_src>
import jax
import jax.numpy as jnp
from jax.experimental import pallas as pl
from jax.experimental.pallas import tpu as pltpu


def manipulator_kernel(x_ref, c_ref, w1_ref, b1_ref, w2x_ref, w2h_ref, b2_ref,
                       w3_ref, b3_ref, o_ref):
    x = x_ref[...]                                   # [Bt, D]
    cin = c_ref[...]                                 # [Bt, C]
    Bt, D = x.shape

    # fc1(c).  The PyTorch ReLU acts on cat([x, fc1(c)]), i.e. on x and h1.
    h1 = jnp.dot(cin, w1_ref[...], preferred_element_type=jnp.float32) + b1_ref[...]
    rx = jnp.maximum(x, 0.0)
    rh = jnp.maximum(h1, 0.0)

    # fc2 over the virtual concat, split into two matmuls (concat eliminated).
    h2 = (jnp.dot(rx, w2x_ref[...], preferred_element_type=jnp.float32)
          + jnp.dot(rh, w2h_ref[...], preferred_element_type=jnp.float32)
          + b2_ref[...])
    r2 = jnp.maximum(h2, 0.0)                        # [Bt, 2D]

    # fc3, column-blocked: for each output row i of the per-sample [D, D]
    # matrix, h3_i = r2 @ W3_i + b3_i ([Bt, D]); y[:, i] = lane-reduce(h3_i * x).
    # Static unroll (D is small here).
    # TODO(synk): for large D move this block loop onto a grid axis so W3
    # streams through VMEM instead of being fully resident (v7x: 64 MiB VMEM).
    lane = jax.lax.broadcasted_iota(jnp.int32, (Bt, D), 1)
    y = jnp.zeros((Bt, D), jnp.float32)
    for i in range(D):
        h3 = jnp.dot(r2, w3_ref[i], preferred_element_type=jnp.float32) + b3_ref[i]
        s = jnp.sum(h3 * x, axis=1, keepdims=True)   # [Bt, 1]
        y = y + jnp.where(lane == i, s, 0.0)

    # F.normalize: y / max(||y||_2, 1e-12)  ==  y * rsqrt(max(||y||^2, 1e-24))
    ss = jnp.sum(y * y, axis=1, keepdims=True)
    inv = jax.lax.rsqrt(jnp.maximum(ss, 1e-24))
    o_ref[...] = (y * inv).astype(o_ref.dtype)


def manipulator(x, c, params, *, batch_tile=None):
    """Forward pass with a batch grid; weights stay resident across steps."""
    w1, b1, w2, b2, w3, b3 = params
    B, D = x.shape
    C = c.shape[1]

    # Host-side (one-time) weight re-layouts; nothing is reshaped in-kernel.
    w2x = w2[:D, :]                                            # acts on x
    w2h = w2[D:, :]                                            # acts on fc1(c)
    w3_blocks = w3.reshape(2 * D, D, D).transpose(1, 0, 2)     # [D, 2D, D]
    b3_blocks = b3.reshape(1, D, D).transpose(1, 0, 2)         # [D, 1, D]

    if batch_tile is None:
        batch_tile = 128 if (B % 128 == 0) else B
    bt = batch_tile
    grid = (pl.cdiv(B, bt),)

    batch_spec = lambda cols: pl.BlockSpec((bt, cols), lambda b: (b, 0))
    resident2 = lambda arr: pl.BlockSpec(arr.shape, lambda b: (0, 0))
    resident3 = lambda arr: pl.BlockSpec(arr.shape, lambda b: (0, 0, 0))

    grid_spec = pltpu.PrefetchScalarGridSpec(
        num_scalar_prefetch=0,
        grid=grid,
        in_specs=[
            batch_spec(D),                      # x
            batch_spec(C),                      # c
            resident2(w1), resident2(b1),
            resident2(w2x), resident2(w2h), resident2(b2),
            resident3(w3_blocks), resident3(b3_blocks),
        ],
        out_specs=batch_spec(D),
    )

    return pl.pallas_call(
        manipulator_kernel,
        out_shape=jax.ShapeDtypeStruct((B, D), jnp.float32),
        grid_spec=grid_spec,
        compiler_params=pltpu.CompilerParams(
            dimension_semantics=("parallel",),      # shard batch across TCs (v7x)
            vmem_limit_bytes=32 * 1024 * 1024,
        ),
    )(x, c, w1, b1, w2x, w2h, b2, w3_blocks, b3_blocks)


def init_params(key, n_class, feature_dim):
    """PyTorch-style uniform(+-1/sqrt(fan_in)) init.
    Weights stored as [in, out]; biases as [1, out]."""
    ks = jax.random.split(key, 6)

    def linear(kw, kb, fan_in, fan_out):
        bound = 1.0 / (fan_in ** 0.5)
        w = jax.random.uniform(kw, (fan_in, fan_out), jnp.float32, -bound, bound)
        b = jax.random.uniform(kb, (1, fan_out), jnp.float32, -bound, bound)
        return w, b

    D = feature_dim
    w1, b1 = linear(ks[0], ks[1], n_class, D)
    w2, b2 = linear(ks[2], ks[3], 2 * D, 2 * D)
    w3, b3 = linear(ks[4], ks[5], 2 * D, D * D)
    return w1, b1, w2, b2, w3, b3


def reference(x, c, params):
    """Pure-JAX reference mirroring the PyTorch forward."""
    w1, b1, w2, b2, w3, b3 = params
    h = c @ w1 + b1
    h = jnp.concatenate([x, h], axis=1)
    h = jnp.maximum(h, 0.0) @ w2 + b2
    h = jnp.maximum(h, 0.0) @ w3 + b3
    cm = h.reshape(x.shape[0], x.shape[1], x.shape[1])
    y = jnp.einsum('bij,bj->bi', cm, x)
    n = jnp.linalg.norm(y, axis=1, keepdims=True)
    return y / jnp.maximum(n, 1e-12)


if __name__ == "__main__":
    B, n_class, feature_dim = 2, 8, 16

    key = jax.random.PRNGKey(0)
    kx, kc, kp = jax.random.split(key, 3)
    x = jax.random.normal(kx, (B, feature_dim), jnp.float32)
    c = jax.random.normal(kc, (B, n_class), jnp.float32)
    params = init_params(kp, n_class, feature_dim)

    out = manipulator(x, c, params)
    out = jax.block_until_ready(out)

    ref = jax.block_until_ready(reference(x, c, params))
    assert out.shape == (B, feature_dim)
    assert jnp.allclose(out, ref, atol=1e-4, rtol=1e-4), "mismatch vs reference"

    print("KERNEL_OK")
</pallas_src>

<mosaic_0001>
module attributes {stable_mosaic.version = 11 : i64} {
  func.func @manipulator_kernel(%arg0: i32, %arg1: memref<2x16xf32, #tpu.memory_space<vmem>>, %arg2: memref<2x8xf32, #tpu.memory_space<vmem>>, %arg3: memref<8x16xf32, #tpu.memory_space<vmem>>, %arg4: memref<1x16xf32, #tpu.memory_space<vmem>>, %arg5: memref<16x32xf32, #tpu.memory_space<vmem>>, %arg6: memref<16x32xf32, #tpu.memory_space<vmem>>, %arg7: memref<1x32xf32, #tpu.memory_space<vmem>>, %arg8: memref<16x32x16xf32, #tpu.memory_space<vmem>>, %arg9: memref<16x1x16xf32, #tpu.memory_space<vmem>>, %arg10: memref<2x16xf32, #tpu.memory_space<vmem>>) attributes {dimension_semantics = [#tpu.dimension_semantics<parallel>], iteration_bounds = array<i64: 1>, scalar_prefetch = 0 : i64, scratch_operands = 0 : i64, tpu.core_type = #tpu.core_type<tc>, window_params = [{transform_indices = @transform_0, window_bounds = array<i64: 2, 16>}, {transform_indices = @transform_1, window_bounds = array<i64: 2, 8>}, {pipeline_mode = #tpu.pipeline_mode<synchronous>, transform_indices = @transform_2, window_bounds = array<i64: 8, 16>}, {pipeline_mode = #tpu.pipeline_mode<synchronous>, transform_indices = @transform_3, window_bounds = array<i64: 1, 16>}, {pipeline_mode = #tpu.pipeline_mode<synchronous>, transform_indices = @transform_4, window_bounds = array<i64: 16, 32>}, {pipeline_mode = #tpu.pipeline_mode<synchronous>, transform_indices = @transform_5, window_bounds = array<i64: 16, 32>}, {pipeline_mode = #tpu.pipeline_mode<synchronous>, transform_indices = @transform_6, window_bounds = array<i64: 1, 32>}, {pipeline_mode = #tpu.pipeline_mode<synchronous>, transform_indices = @transform_7, window_bounds = array<i64: 16, 32, 16>}, {pipeline_mode = #tpu.pipeline_mode<synchronous>, transform_indices = @transform_8, window_bounds = array<i64: 16, 1, 16>}, {transform_indices = @transform_9, window_bounds = array<i64: 2, 16>}]} {
    %c0 = arith.constant 0 : index
    %c0_0 = arith.constant 0 : index
    %0 = vector.load %arg1[%c0, %c0_0] : memref<2x16xf32, #tpu.memory_space<vmem>>, vector<2x16xf32>
    %c0_1 = arith.constant 0 : index
    %c0_2 = arith.constant 0 : index
    %1 = vector.load %arg2[%c0_1, %c0_2] : memref<2x8xf32, #tpu.memory_space<vmem>>, vector<2x8xf32>
    %c0_3 = arith.constant 0 : index
    %c0_4 = arith.constant 0 : index
    %2 = vector.load %arg3[%c0_3, %c0_4] : memref<8x16xf32, #tpu.memory_space<vmem>>, vector<8x16xf32>
    %cst = arith.constant dense<0.000000e+00> : vector<2x16xf32>
    %3 = tpu.matmul %1, %2, %cst {dimension_numbers = #tpu.dot_dimension_numbers<[1], [0], [0], [1], [0, 0, 1, 1], [], []>} : vector<2x8xf32>, vector<8x16xf32>, vector<2x16xf32> -> vector<2x16xf32>
    %c0_5 = arith.constant 0 : index
    %c0_6 = arith.constant 0 : index
    %4 = vector.load %arg4[%c0_5, %c0_6] : memref<1x16xf32, #tpu.memory_space<vmem>>, vector<1x16xf32>
    %5 = vector.broadcast %4 : vector<1x16xf32> to vector<2x16xf32>
    %6 = arith.addf %3, %5 : vector<2x16xf32>
    %cst_7 = arith.constant 0.000000e+00 : f32
    %7 = vector.broadcast %cst_7 : f32 to vector<2x16xf32>
    %8 = arith.maximumf %0, %7 : vector<2x16xf32>
    %cst_8 = arith.constant 0.000000e+00 : f32
    %9 = vector.broadcast %cst_8 : f32 to vector<2x16xf32>
    %10 = arith.maximumf %6, %9 : vector<2x16xf32>
    %c0_9 = arith.constant 0 : index
    %c0_10 = arith.constant 0 : index
    %11 = vector.load %arg5[%c0_9, %c0_10] : memref<16x32xf32, #tpu.memory_space<vmem>>, vector<16x32xf32>
    %cst_11 = arith.constant dense<0.000000e+00> : vector<2x32xf32>
    %12 = tpu.matmul %8, %11, %cst_11 {dimension_numbers = #tpu.dot_dimension_numbers<[1], [0], [0], [1], [0, 0, 1, 1], [], []>} : vector<2x16xf32>, vector<16x32xf32>, vector<2x32xf32> -> vector<2x32xf32>
    %c0_12 = arith.constant 0 : index
    %c0_13 = arith.constant 0 : index
    %13 = vector.load %arg6[%c0_12, %c0_13] : memref<16x32xf32, #tpu.memory_space<vmem>>, vector<16x32xf32>
    %cst_14 = arith.constant dense<0.000000e+00> : vector<2x32xf32>
    %14 = tpu.matmul %10, %13, %cst_14 {dimension_numbers = #tpu.dot_dimension_numbers<[1], [0], [0], [1], [0, 0, 1, 1], [], []>} : vector<2x16xf32>, vector<16x32xf32>, vector<2x32xf32> -> vector<2x32xf32>
    %15 = arith.addf %12, %14 : vector<2x32xf32>
    %c0_15 = arith.constant 0 : index
    %c0_16 = arith.constant 0 : index
    %16 = vector.load %arg7[%c0_15, %c0_16] : memref<1x32xf32, #tpu.memory_space<vmem>>, vector<1x32xf32>
    %17 = vector.broadcast %16 : vector<1x32xf32> to vector<2x32xf32>
    %18 = arith.addf %15, %17 : vector<2x32xf32>
    %cst_17 = arith.constant 0.000000e+00 : f32
    %19 = vector.broadcast %cst_17 : f32 to vector<2x32xf32>
    %20 = arith.maximumf %18, %19 : vector<2x32xf32>
    %21 = tpu.iota {dimensions = array<i32: 1>} : vector<2x16xi32>
    %cst_18 = arith.constant 0.000000e+00 : f32
    %22 = vector.broadcast %cst_18 : f32 to vector<2x16xf32>
    %c0_19 = arith.constant 0 : index
    %c0_20 = arith.constant 0 : index
    %c0_21 = arith.constant 0 : index
    %23 = vector.load %arg8[%c0_19, %c0_20, %c0_21] : memref<16x32x16xf32, #tpu.memory_space<vmem>>, vector<1x32x16xf32>
    %24 = vector.shape_cast %23 : vector<1x32x16xf32> to vector<32x16xf32>
    %cst_22 = arith.constant dense<0.000000e+00> : vector<2x16xf32>
    %25 = tpu.matmul %20, %24, %cst_22 {dimension_numbers = #tpu.dot_dimension_numbers<[1], [0], [0], [1], [0, 0, 1, 1], [], []>} : vector<2x32xf32>, vector<32x16xf32>, vector<2x16xf32> -> vector<2x16xf32>
    %c0_23 = arith.constant 0 : index
    %c0_24 = arith.constant 0 : index
    %c0_25 = arith.constant 0 : index
    %26 = vector.load %arg9[%c0_23, %c0_24, %c0_25] : memref<16x1x16xf32, #tpu.memory_space<vmem>>, vector<1x1x16xf32>
    %27 = vector.shape_cast %26 : vector<1x1x16xf32> to vector<1x16xf32>
    %28 = vector.broadcast %27 : vector<1x16xf32> to vector<2x16xf32>
    %29 = arith.addf %25, %28 : vector<2x16xf32>
    %30 = arith.mulf %29, %0 : vector<2x16xf32>
    %cst_26 = arith.constant dense<0.000000e+00> : vector<2xf32>
    %31 = vector.multi_reduction <add>, %30, %cst_26 [1] : vector<2x16xf32> to vector<2xf32>
    %32 = vector.shape_cast %31 : vector<2xf32> to vector<2x1xf32>
    %c0_i32 = arith.constant 0 : i32
    %33 = vector.broadcast %c0_i32 : i32 to vector<2x16xi32>
    %34 = arith.cmpi eq, %21, %33 : vector<2x16xi32>
    %cst_27 = arith.constant 0.000000e+00 : f32
    %35 = vector.shape_cast %32 : vector<2x1xf32> to vector<2x1xf32>
    %36 = vector.broadcast %35 : vector<2x1xf32> to vector<2x16xf32>
    %37 = vector.broadcast %cst_27 : f32 to vector<2x16xf32>
    %38 = arith.select %34, %36, %37 : vector<2x16xi1>, vector<2x16xf32>
    %39 = arith.addf %22, %38 : vector<2x16xf32>
    %c1 = arith.constant 1 : index
    %c0_28 = arith.constant 0 : index
    %c0_29 = arith.constant 0 : index
    %40 = vector.load %arg8[%c1, %c0_28, %c0_29] : memref<16x32x16xf32, #tpu.memory_space<vmem>>, vector<1x32x16xf32>
    %41 = vector.shape_cast %40 : vector<1x32x16xf32> to vector<32x16xf32>
    %cst_30 = arith.constant dense<0.000000e+00> : vector<2x16xf32>
    %42 = tpu.matmul %20, %41, %cst_30 {dimension_numbers = #tpu.dot_dimension_numbers<[1], [0], [0], [1], [0, 0, 1, 1], [], []>} : vector<2x32xf32>, vector<32x16xf32>, vector<2x16xf32> -> vector<2x16xf32>
    %c1_31 = arith.constant 1 : index
    %c0_32 = arith.constant 0 : index
    %c0_33 = arith.constant 0 : index
    %43 = vector.load %arg9[%c1_31, %c0_32, %c0_33] : memref<16x1x16xf32, #tpu.memory_space<vmem>>, vector<1x1x16xf32>
    %44 = vector.shape_cast %43 : vector<1x1x16xf32> to vector<1x16xf32>
    %45 = vector.broadcast %44 : vector<1x16xf32> to vector<2x16xf32>
    %46 = arith.addf %42, %45 : vector<2x16xf32>
    %47 = arith.mulf %46, %0 : vector<2x16xf32>
    %cst_34 = arith.constant dense<0.000000e+00> : vector<2xf32>
    %48 = vector.multi_reduction <add>, %47, %cst_34 [1] : vector<2x16xf32> to vector<2xf32>
    %49 = vector.shape_cast %48 : vector<2xf32> to vector<2x1xf32>
    %c1_i32 = arith.constant 1 : i32
    %50 = vector.broadcast %c1_i32 : i32 to vector<2x16xi32>
    %51 = arith.cmpi eq, %21, %50 : vector<2x16xi32>
    %cst_35 = arith.constant 0.000000e+00 : f32
    %52 = vector.shape_cast %49 : vector<2x1xf32> to vector<2x1xf32>
    %53 = vector.broadcast %52 : vector<2x1xf32> to vector<2x16xf32>
    %54 = vector.broadcast %cst_35 : f32 to vector<2x16xf32>
    %55 = arith.select %51, %53, %54 : vector<2x16xi1>, vector<2x16xf32>
    %56 = arith.addf %39, %55 : vector<2x16xf32>
    %c2 = arith.constant 2 : index
    %c0_36 = arith.constant 0 : index
    %c0_37 = arith.constant 0 : index
    %57 = vector.load %arg8[%c2, %c0_36, %c0_37] : memref<16x32x16xf32, #tpu.memory_space<vmem>>, vector<1x32x16xf32>
    %58 = vector.shape_cast %57 : vector<1x32x16xf32> to vector<32x16xf32>
    %cst_38 = arith.constant dense<0.000000e+00> : vector<2x16xf32>
    %59 = tpu.matmul %20, %58, %cst_38 {dimension_numbers = #tpu.dot_dimension_numbers<[1], [0], [0], [1], [0, 0, 1, 1], [], []>} : vector<2x32xf32>, vector<32x16xf32>, vector<2x16xf32> -> vector<2x16xf32>
    %c2_39 = arith.constant 2 : index
    %c0_40 = arith.constant 0 : index
    %c0_41 = arith.constant 0 : index
    %60 = vector.load %arg9[%c2_39, %c0_40, %c0_41] : memref<16x1x16xf32, #tpu.memory_space<vmem>>, vector<1x1x16xf32>
    %61 = vector.shape_cast %60 : vector<1x1x16xf32> to vector<1x16xf32>
    %62 = vector.broadcast %61 : vector<1x16xf32> to vector<2x16xf32>
    %63 = arith.addf %59, %62 : vector<2x16xf32>
    %64 = arith.mulf %63, %0 : vector<2x16xf32>
    %cst_42 = arith.constant dense<0.000000e+00> : vector<2xf32>
    %65 = vector.multi_reduction <add>, %64, %cst_42 [1] : vector<2x16xf32> to vector<2xf32>
    %66 = vector.shape_cast %65 : vector<2xf32> to vector<2x1xf32>
    %c2_i32 = arith.constant 2 : i32
    %67 = vector.broadcast %c2_i32 : i32 to vector<2x16xi32>
    %68 = arith.cmpi eq, %21, %67 : vector<2x16xi32>
    %cst_43 = arith.constant 0.000000e+00 : f32
    %69 = vector.shape_cast %66 : vector<2x1xf32> to vector<2x1xf32>
    %70 = vector.broadcast %69 : vector<2x1xf32> to vector<2x16xf32>
    %71 = vector.broadcast %cst_43 : f32 to vector<2x16xf32>
    %72 = arith.select %68, %70, %71 : vector<2x16xi1>, vector<2x16xf32>
    %73 = arith.addf %56, %72 : vector<2x16xf32>
    %c3 = arith.constant 3 : index
    %c0_44 = arith.constant 0 : index
    %c0_45 = arith.constant 0 : index
    %74 = vector.load %arg8[%c3, %c0_44, %c0_45] : memref<16x32x16xf32, #tpu.memory_space<vmem>>, vector<1x32x16xf32>
    %75 = vector.shape_cast %74 : vector<1x32x16xf32> to vector<32x16xf32>
    %cst_46 = arith.constant dense<0.000000e+00> : vector<2x16xf32>
    %76 = tpu.matmul %20, %75, %cst_46 {dimension_numbers = #tpu.dot_dimension_numbers<[1], [0], [0], [1], [0, 0, 1, 1], [], []>} : vector<2x32xf32>, vector<32x16xf32>, vector<2x16xf32> -> vector<2x16xf32>
    %c3_47 = arith.constant 3 : index
    %c0_48 = arith.constant 0 : index
    %c0_49 = arith.constant 0 : index
    %77 = vector.load %arg9[%c3_47, %c0_48, %c0_49] : memref<16x1x16xf32, #tpu.memory_space<vmem>>, vector<1x1x16xf32>
    %78 = vector.shape_cast %77 : vector<1x1x16xf32> to vector<1x16xf32>
    %79 = vector.broadcast %78 : vector<1x16xf32> to vector<2x16xf32>
    %80 = arith.addf %76, %79 : vector<2x16xf32>
    %81 = arith.mulf %80, %0 : vector<2x16xf32>
    %cst_50 = arith.constant dense<0.000000e+00> : vector<2xf32>
    %82 = vector.multi_reduction <add>, %81, %cst_50 [1] : vector<2x16xf32> to vector<2xf32>
    %83 = vector.shape_cast %82 : vector<2xf32> to vector<2x1xf32>
    %c3_i32 = arith.constant 3 : i32
    %84 = vector.broadcast %c3_i32 : i32 to vector<2x16xi32>
    %85 = arith.cmpi eq, %21, %84 : vector<2x16xi32>
    %cst_51 = arith.constant 0.000000e+00 : f32
    %86 = vector.shape_cast %83 : vector<2x1xf32> to vector<2x1xf32>
    %87 = vector.broadcast %86 : vector<2x1xf32> to vector<2x16xf32>
    %88 = vector.broadcast %cst_51 : f32 to vector<2x16xf32>
    %89 = arith.select %85, %87, %88 : vector<2x16xi1>, vector<2x16xf32>
    %90 = arith.addf %73, %89 : vector<2x16xf32>
    %c4 = arith.constant 4 : index
    %c0_52 = arith.constant 0 : index
    %c0_53 = arith.constant 0 : index
    %91 = vector.load %arg8[%c4, %c0_52, %c0_53] : memref<16x32x16xf32, #tpu.memory_space<vmem>>, vector<1x32x16xf32>
    %92 = vector.shape_cast %91 : vector<1x32x16xf32> to vector<32x16xf32>
    %cst_54 = arith.constant dense<0.000000e+00> : vector<2x16xf32>
    %93 = tpu.matmul %20, %92, %cst_54 {dimension_numbers = #tpu.dot_dimension_numbers<[1], [0], [0], [1], [0, 0, 1, 1], [], []>} : vector<2x32xf32>, vector<32x16xf32>, vector<2x16xf32> -> vector<2x16xf32>
    %c4_55 = arith.constant 4 : index
    %c0_56 = arith.constant 0 : index
    %c0_57 = arith.constant 0 : index
    %94 = vector.load %arg9[%c4_55, %c0_56, %c0_57] : memref<16x1x16xf32, #tpu.memory_space<vmem>>, vector<1x1x16xf32>
    %95 = vector.shape_cast %94 : vector<1x1x16xf32> to vector<1x16xf32>
    %96 = vector.broadcast %95 : vector<1x16xf32> to vector<2x16xf32>
    %97 = arith.addf %93, %96 : vector<2x16xf32>
    %98 = arith.mulf %97, %0 : vector<2x16xf32>
    %cst_58 = arith.constant dense<0.000000e+00> : vector<2xf32>
    %99 = vector.multi_reduction <add>, %98, %cst_58 [1] : vector<2x16xf32> to vector<2xf32>
    %100 = vector.shape_cast %99 : vector<2xf32> to vector<2x1xf32>
    %c4_i32 = arith.constant 4 : i32
    %101 = vector.broadcast %c4_i32 : i32 to vector<2x16xi32>
    %102 = arith.cmpi eq, %21, %101 : vector<2x16xi32>
    %cst_59 = arith.constant 0.000000e+00 : f32
    %103 = vector.shape_cast %100 : vector<2x1xf32> to vector<2x1xf32>
    %104 = vector.broadcast %103 : vector<2x1xf32> to vector<2x16xf32>
    %105 = vector.broadcast %cst_59 : f32 to vector<2x16xf32>
    %106 = arith.select %102, %104, %105 : vector<2x16xi1>, vector<2x16xf32>
    %107 = arith.addf %90, %106 : vector<2x16xf32>
    %c5 = arith.constant 5 : index
    %c0_60 = arith.constant 0 : index
    %c0_61 = arith.constant 0 : index
    %108 = vector.load %arg8[%c5, %c0_60, %c0_61] : memref<16x32x16xf32, #tpu.memory_space<vmem>>, vector<1x32x16xf32>
    %109 = vector.shape_cast %108 : vector<1x32x16xf32> to vector<32x16xf32>
    %cst_62 = arith.constant dense<0.000000e+00> : vector<2x16xf32>
    %110 = tpu.matmul %20, %109, %cst_62 {dimension_numbers = #tpu.dot_dimension_numbers<[1], [0], [0], [1], [0, 0, 1, 1], [], []>} : vector<2x32xf32>, vector<32x16xf32>, vector<2x16xf32> -> vector<2x16xf32>
    %c5_63 = arith.constant 5 : index
    %c0_64 = arith.constant 0 : index
    %c0_65 = arith.constant 0 : index
    %111 = vector.load %arg9[%c5_63, %c0_64, %c0_65] : memref<16x1x16xf32, #tpu.memory_space<vmem>>, vector<1x1x16xf32>
    %112 = vector.shape_cast %111 : vector<1x1x16xf32> to vector<1x16xf32>
    %113 = vector.broadcast %112 : vector<1x16xf32> to vector<2x16xf32>
    %114 = arith.addf %110, %113 : vector<2x16xf32>
    %115 = arith.mulf %114, %0 : vector<2x16xf32>
    %cst_66 = arith.constant dense<0.000000e+00> : vector<2xf32>
    %116 = vector.multi_reduction <add>, %115, %cst_66 [1] : vector<2x16xf32> to vector<2xf32>
    %117 = vector.shape_cast %116 : vector<2xf32> to vector<2x1xf32>
    %c5_i32 = arith.constant 5 : i32
    %118 = vector.broadcast %c5_i32 : i32 to vector<2x16xi32>
    %119 = arith.cmpi eq, %21, %118 : vector<2x16xi32>
    %cst_67 = arith.constant 0.000000e+00 : f32
    %120 = vector.shape_cast %117 : vector<2x1xf32> to vector<2x1xf32>
    %121 = vector.broadcast %120 : vector<2x1xf32> to vector<2x16xf32>
    %122 = vector.broadcast %cst_67 : f32 to vector<2x16xf32>
    %123 = arith.select %119, %121, %122 : vector<2x16xi1>, vector<2x16xf32>
    %124 = arith.addf %107, %123 : vector<2x16xf32>
    %c6 = arith.constant 6 : index
    %c0_68 = arith.constant 0 : index
    %c0_69 = arith.constant 0 : index
    %125 = vector.load %arg8[%c6, %c0_68, %c0_69] : memref<16x32x16xf32, #tpu.memory_space<vmem>>, vector<1x32x16xf32>
    %126 = vector.shape_cast %125 : vector<1x32x16xf32> to vector<32x16xf32>
    %cst_70 = arith.constant dense<0.000000e+00> : vector<2x16xf32>
    %127 = tpu.matmul %20, %126, %cst_70 {dimension_numbers = #tpu.dot_dimension_numbers<[1], [0], [0], [1], [0, 0, 1, 1], [], []>} : vector<2x32xf32>, vector<32x16xf32>, vector<2x16xf32> -> vector<2x16xf32>
    %c6_71 = arith.constant 6 : index
    %c0_72 = arith.constant 0 : index
    %c0_73 = arith.constant 0 : index
    %128 = vector.load %arg9[%c6_71, %c0_72, %c0_73] : memref<16x1x16xf32, #tpu.memory_space<vmem>>, vector<1x1x16xf32>
    %129 = vector.shape_cast %128 : vector<1x1x16xf32> to vector<1x16xf32>
    %130 = vector.broadcast %129 : vector<1x16xf32> to vector<2x16xf32>
    %131 = arith.addf %127, %130 : vector<2x16xf32>
    %132 = arith.mulf %131, %0 : vector<2x16xf32>
    %cst_74 = arith.constant dense<0.000000e+00> : vector<2xf32>
    %133 = vector.multi_reduction <add>, %132, %cst_74 [1] : vector<2x16xf32> to vector<2xf32>
    %134 = vector.shape_cast %133 : vector<2xf32> to vector<2x1xf32>
    %c6_i32 = arith.constant 6 : i32
    %135 = vector.broadcast %c6_i32 : i32 to vector<2x16xi32>
    %136 = arith.cmpi eq, %21, %135 : vector<2x16xi32>
    %cst_75 = arith.constant 0.000000e+00 : f32
    %137 = vector.shape_cast %134 : vector<2x1xf32> to vector<2x1xf32>
    %138 = vector.broadcast %137 : vector<2x1xf32> to vector<2x16xf32>
    %139 = vector.broadcast %cst_75 : f32 to vector<2x16xf32>
    %140 = arith.select %136, %138, %139 : vector<2x16xi1>, vector<2x16xf32>
    %141 = arith.addf %124, %140 : vector<2x16xf32>
    %c7 = arith.constant 7 : index
    %c0_76 = arith.constant 0 : index
    %c0_77 = arith.constant 0 : index
    %142 = vector.load %arg8[%c7, %c0_76, %c0_77] : memref<16x32x16xf32, #tpu.memory_space<vmem>>, vector<1x32x16xf32>
    %143 = vector.shape_cast %142 : vector<1x32x16xf32> to vector<32x16xf32>
    %cst_78 = arith.constant dense<0.000000e+00> : vector<2x16xf32>
    %144 = tpu.matmul %20, %143, %cst_78 {dimension_numbers = #tpu.dot_dimension_numbers<[1], [0], [0], [1], [0, 0, 1, 1], [], []>} : vector<2x32xf32>, vector<32x16xf32>, vector<2x16xf32> -> vector<2x16xf32>
    %c7_79 = arith.constant 7 : index
    %c0_80 = arith.constant 0 : index
    %c0_81 = arith.constant 0 : index
    %145 = vector.load %arg9[%c7_79, %c0_80, %c0_81] : memref<16x1x16xf32, #tpu.memory_space<vmem>>, vector<1x1x16xf32>
    %146 = vector.shape_cast %145 : vector<1x1x16xf32> to vector<1x16xf32>
    %147 = vector.broadcast %146 : vector<1x16xf32> to vector<2x16xf32>
    %148 = arith.addf %144, %147 : vector<2x16xf32>
    %149 = arith.mulf %148, %0 : vector<2x16xf32>
    %cst_82 = arith.constant dense<0.000000e+00> : vector<2xf32>
    %150 = vector.multi_reduction <add>, %149, %cst_82 [1] : vector<2x16xf32> to vector<2xf32>
    %151 = vector.shape_cast %150 : vector<2xf32> to vector<2x1xf32>
    %c7_i32 = arith.constant 7 : i32
    %152 = vector.broadcast %c7_i32 : i32 to vector<2x16xi32>
    %153 = arith.cmpi eq, %21, %152 : vector<2x16xi32>
    %cst_83 = arith.constant 0.000000e+00 : f32
    %154 = vector.shape_cast %151 : vector<2x1xf32> to vector<2x1xf32>
    %155 = vector.broadcast %154 : vector<2x1xf32> to vector<2x16xf32>
    %156 = vector.broadcast %cst_83 : f32 to vector<2x16xf32>
    %157 = arith.select %153, %155, %156 : vector<2x16xi1>, vector<2x16xf32>
    %158 = arith.addf %141, %157 : vector<2x16xf32>
    %c8 = arith.constant 8 : index
    %c0_84 = arith.constant 0 : index
    %c0_85 = arith.constant 0 : index
    %159 = vector.load %arg8[%c8, %c0_84, %c0_85] : memref<16x32x16xf32, #tpu.memory_space<vmem>>, vector<1x32x16xf32>
    %160 = vector.shape_cast %159 : vector<1x32x16xf32> to vector<32x16xf32>
    %cst_86 = arith.constant dense<0.000000e+00> : vector<2x16xf32>
    %161 = tpu.matmul %20, %160, %cst_86 {dimension_numbers = #tpu.dot_dimension_numbers<[1], [0], [0], [1], [0, 0, 1, 1], [], []>} : vector<2x32xf32>, vector<32x16xf32>, vector<2x16xf32> -> vector<2x16xf32>
    %c8_87 = arith.constant 8 : index
    %c0_88 = arith.constant 0 : index
    %c0_89 = arith.constant 0 : index
    %162 = vector.load %arg9[%c8_87, %c0_88, %c0_89] : memref<16x1x16xf32, #tpu.memory_space<vmem>>, vector<1x1x16xf32>
    %163 = vector.shape_cast %162 : vector<1x1x16xf32> to vector<1x16xf32>
    %164 = vector.broadcast %163 : vector<1x16xf32> to vector<2x16xf32>
    %165 = arith.addf %161, %164 : vector<2x16xf32>
    %166 = arith.mulf %165, %0 : vector<2x16xf32>
    %cst_90 = arith.constant dense<0.000000e+00> : vector<2xf32>
    %167 = vector.multi_reduction <add>, %166, %cst_90 [1] : vector<2x16xf32> to vector<2xf32>
    %168 = vector.shape_cast %167 : vector<2xf32> to vector<2x1xf32>
    %c8_i32 = arith.constant 8 : i32
    %169 = vector.broadcast %c8_i32 : i32 to vector<2x16xi32>
    %170 = arith.cmpi eq, %21, %169 : vector<2x16xi32>
    %cst_91 = arith.constant 0.000000e+00 : f32
    %171 = vector.shape_cast %168 : vector<2x1xf32> to vector<2x1xf32>
    %172 = vector.broadcast %171 : vector<2x1xf32> to vector<2x16xf32>
    %173 = vector.broadcast %cst_91 : f32 to vector<2x16xf32>
    %174 = arith.select %170, %172, %173 : vector<2x16xi1>, vector<2x16xf32>
    %175 = arith.addf %158, %174 : vector<2x16xf32>
    %c9 = arith.constant 9 : index
    %c0_92 = arith.constant 0 : index
    %c0_93 = arith.constant 0 : index
    %176 = vector.load %arg8[%c9, %c0_92, %c0_93] : memref<16x32x16xf32, #tpu.memory_space<vmem>>, vector<1x32x16xf32>
    %177 = vector.shape_cast %176 : vector<1x32x16xf32> to vector<32x16xf32>
    %cst_94 = arith.constant dense<0.000000e+00> : vector<2x16xf32>
    %178 = tpu.matmul %20, %177, %cst_94 {dimension_numbers = #tpu.dot_dimension_numbers<[1], [0], [0], [1], [0, 0, 1, 1], [], []>} : vector<2x32xf32>, vector<32x16xf32>, vector<2x16xf32> -> vector<2x16xf32>
    %c9_95 = arith.constant 9 : index
    %c0_96 = arith.constant 0 : index
    %c0_97 = arith.constant 0 : index
    %179 = vector.load %arg9[%c9_95, %c0_96, %c0_97] : memref<16x1x16xf32, #tpu.memory_space<vmem>>, vector<1x1x16xf32>
    %180 = vector.shape_cast %179 : vector<1x1x16xf32> to vector<1x16xf32>
    %181 = vector.broadcast %180 : vector<1x16xf32> to vector<2x16xf32>
    %182 = arith.addf %178, %181 : vector<2x16xf32>
    %183 = arith.mulf %182, %0 : vector<2x16xf32>
    %cst_98 = arith.constant dense<0.000000e+00> : vector<2xf32>
    %184 = vector.multi_reduction <add>, %183, %cst_98 [1] : vector<2x16xf32> to vector<2xf32>
    %185 = vector.shape_cast %184 : vector<2xf32> to vector<2x1xf32>
    %c9_i32 = arith.constant 9 : i32
    %186 = vector.broadcast %c9_i32 : i32 to vector<2x16xi32>
    %187 = arith.cmpi eq, %21, %186 : vector<2x16xi32>
    %cst_99 = arith.constant 0.000000e+00 : f32
    %188 = vector.shape_cast %185 : vector<2x1xf32> to vector<2x1xf32>
    %189 = vector.broadcast %188 : vector<2x1xf32> to vector<2x16xf32>
    %190 = vector.broadcast %cst_99 : f32 to vector<2x16xf32>
    %191 = arith.select %187, %189, %190 : vector<2x16xi1>, vector<2x16xf32>
    %192 = arith.addf %175, %191 : vector<2x16xf32>
    %c10 = arith.constant 10 : index
    %c0_100 = arith.constant 0 : index
    %c0_101 = arith.constant 0 : index
    %193 = vector.load %arg8[%c10, %c0_100, %c0_101] : memref<16x32x16xf32, #tpu.memory_space<vmem>>, vector<1x32x16xf32>
    %194 = vector.shape_cast %193 : vector<1x32x16xf32> to vector<32x16xf32>
    %cst_102 = arith.constant dense<0.000000e+00> : vector<2x16xf32>
    %195 = tpu.matmul %20, %194, %cst_102 {dimension_numbers = #tpu.dot_dimension_numbers<[1], [0], [0], [1], [0, 0, 1, 1], [], []>} : vector<2x32xf32>, vector<32x16xf32>, vector<2x16xf32> -> vector<2x16xf32>
    %c10_103 = arith.constant 10 : index
    %c0_104 = arith.constant 0 : index
    %c0_105 = arith.constant 0 : index
    %196 = vector.load %arg9[%c10_103, %c0_104, %c0_105] : memref<16x1x16xf32, #tpu.memory_space<vmem>>, vector<1x1x16xf32>
    %197 = vector.shape_cast %196 : vector<1x1x16xf32> to vector<1x16xf32>
    %198 = vector.broadcast %197 : vector<1x16xf32> to vector<2x16xf32>
    %199 = arith.addf %195, %198 : vector<2x16xf32>
    %200 = arith.mulf %199, %0 : vector<2x16xf32>
    %cst_106 = arith.constant dense<0.000000e+00> : vector<2xf32>
    %201 = vector.multi_reduction <add>, %200, %cst_106 [1] : vector<2x16xf32> to vector<2xf32>
    %202 = vector.shape_cast %201 : vector<2xf32> to vector<2x1xf32>
    %c10_i32 = arith.constant 10 : i32
    %203 = vector.broadcast %c10_i32 : i32 to vector<2x16xi32>
    %204 = arith.cmpi eq, %21, %203 : vector<2x16xi32>
    %cst_107 = arith.constant 0.000000e+00 : f32
    %205 = vector.shape_cast %202 : vector<2x1xf32> to vector<2x1xf32>
    %206 = vector.broadcast %205 : vector<2x1xf32> to vector<2x16xf32>
    %207 = vector.broadcast %cst_107 : f32 to vector<2x16xf32>
    %208 = arith.select %204, %206, %207 : vector<2x16xi1>, vector<2x16xf32>
    %209 = arith.addf %192, %208 : vector<2x16xf32>
    %c11 = arith.constant 11 : index
    %c0_108 = arith.constant 0 : index
    %c0_109 = arith.constant 0 : index
    %210 = vector.load %arg8[%c11, %c0_108, %c0_109] : memref<16x32x16xf32, #tpu.memory_space<vmem>>, vector<1x32x16xf32>
    %211 = vector.shape_cast %210 : vector<1x32x16xf32> to vector<32x16xf32>
    %cst_110 = arith.constant dense<0.000000e+00> : vector<2x16xf32>
    %212 = tpu.matmul %20, %211, %cst_110 {dimension_numbers = #tpu.dot_dimension_numbers<[1], [0], [0], [1], [0, 0, 1, 1], [], []>} : vector<2x32xf32>, vector<32x16xf32>, vector<2x16xf32> -> vector<2x16xf32>
    %c11_111 = arith.constant 11 : index
    %c0_112 = arith.constant 0 : index
    %c0_113 = arith.constant 0 : index
    %213 = vector.load %arg9[%c11_111, %c0_112, %c0_113] : memref<16x1x16xf32, #tpu.memory_space<vmem>>, vector<1x1x16xf32>
    %214 = vector.shape_cast %213 : vector<1x1x16xf32> to vector<1x16xf32>
    %215 = vector.broadcast %214 : vector<1x16xf32> to vector<2x16xf32>
    %216 = arith.addf %212, %215 : vector<2x16xf32>
    %217 = arith.mulf %216, %0 : vector<2x16xf32>
    %cst_114 = arith.constant dense<0.000000e+00> : vector<2xf32>
    %218 = vector.multi_reduction <add>, %217, %cst_114 [1] : vector<2x16xf32> to vector<2xf32>
    %219 = vector.shape_cast %218 : vector<2xf32> to vector<2x1xf32>
    %c11_i32 = arith.constant 11 : i32
    %220 = vector.broadcast %c11_i32 : i32 to vector<2x16xi32>
    %221 = arith.cmpi eq, %21, %220 : vector<2x16xi32>
    %cst_115 = arith.constant 0.000000e+00 : f32
    %222 = vector.shape_cast %219 : vector<2x1xf32> to vector<2x1xf32>
    %223 = vector.broadcast %222 : vector<2x1xf32> to vector<2x16xf32>
    %224 = vector.broadcast %cst_115 : f32 to vector<2x16xf32>
    %225 = arith.select %221, %223, %224 : vector<2x16xi1>, vector<2x16xf32>
    %226 = arith.addf %209, %225 : vector<2x16xf32>
    %c12 = arith.constant 12 : index
    %c0_116 = arith.constant 0 : index
    %c0_117 = arith.constant 0 : index
    %227 = vector.load %arg8[%c12, %c0_116, %c0_117] : memref<16x32x16xf32, #tpu.memory_space<vmem>>, vector<1x32x16xf32>
    %228 = vector.shape_cast %227 : vector<1x32x16xf32> to vector<32x16xf32>
    %cst_118 = arith.constant dense<0.000000e+00> : vector<2x16xf32>
    %229 = tpu.matmul %20, %228, %cst_118 {dimension_numbers = #tpu.dot_dimension_numbers<[1], [0], [0], [1], [0, 0, 1, 1], [], []>} : vector<2x32xf32>, vector<32x16xf32>, vector<2x16xf32> -> vector<2x16xf32>
    %c12_119 = arith.constant 12 : index
    %c0_120 = arith.constant 0 : index
    %c0_121 = arith.constant 0 : index
    %230 = vector.load %arg9[%c12_119, %c0_120, %c0_121] : memref<16x1x16xf32, #tpu.memory_space<vmem>>, vector<1x1x16xf32>
    %231 = vector.shape_cast %230 : vector<1x1x16xf32> to vector<1x16xf32>
    %232 = vector.broadcast %231 : vector<1x16xf32> to vector<2x16xf32>
    %233 = arith.addf %229, %232 : vector<2x16xf32>
    %234 = arith.mulf %233, %0 : vector<2x16xf32>
    %cst_122 = arith.constant dense<0.000000e+00> : vector<2xf32>
    %235 = vector.multi_reduction <add>, %234, %cst_122 [1] : vector<2x16xf32> to vector<2xf32>
    %236 = vector.shape_cast %235 : vector<2xf32> to vector<2x1xf32>
    %c12_i32 = arith.constant 12 : i32
    %237 = vector.broadcast %c12_i32 : i32 to vector<2x16xi32>
    %238 = arith.cmpi eq, %21, %237 : vector<2x16xi32>
    %cst_123 = arith.constant 0.000000e+00 : f32
    %239 = vector.shape_cast %236 : vector<2x1xf32> to vector<2x1xf32>
    %240 = vector.broadcast %239 : vector<2x1xf32> to vector<2x16xf32>
    %241 = vector.broadcast %cst_123 : f32 to vector<2x16xf32>
    %242 = arith.select %238, %240, %241 : vector<2x16xi1>, vector<2x16xf32>
    %243 = arith.addf %226, %242 : vector<2x16xf32>
    %c13 = arith.constant 13 : index
    %c0_124 = arith.constant 0 : index
    %c0_125 = arith.constant 0 : index
    %244 = vector.load %arg8[%c13, %c0_124, %c0_125] : memref<16x32x16xf32, #tpu.memory_space<vmem>>, vector<1x32x16xf32>
    %245 = vector.shape_cast %244 : vector<1x32x16xf32> to vector<32x16xf32>
    %cst_126 = arith.constant dense<0.000000e+00> : vector<2x16xf32>
    %246 = tpu.matmul %20, %245, %cst_126 {dimension_numbers = #tpu.dot_dimension_numbers<[1], [0], [0], [1], [0, 0, 1, 1], [], []>} : vector<2x32xf32>, vector<32x16xf32>, vector<2x16xf32> -> vector<2x16xf32>
    %c13_127 = arith.constant 13 : index
    %c0_128 = arith.constant 0 : index
    %c0_129 = arith.constant 0 : index
    %247 = vector.load %arg9[%c13_127, %c0_128, %c0_129] : memref<16x1x16xf32, #tpu.memory_space<vmem>>, vector<1x1x16xf32>
    %248 = vector.shape_cast %247 : vector<1x1x16xf32> to vector<1x16xf32>
    %249 = vector.broadcast %248 : vector<1x16xf32> to vector<2x16xf32>
    %250 = arith.addf %246, %249 : vector<2x16xf32>
    %251 = arith.mulf %250, %0 : vector<2x16xf32>
    %cst_130 = arith.constant dense<0.000000e+00> : vector<2xf32>
    %252 = vector.multi_reduction <add>, %251, %cst_130 [1] : vector<2x16xf32> to vector<2xf32>
    %253 = vector.shape_cast %252 : vector<2xf32> to vector<2x1xf32>
    %c13_i32 = arith.constant 13 : i32
    %254 = vector.broadcast %c13_i32 : i32 to vector<2x16xi32>
    %255 = arith.cmpi eq, %21, %254 : vector<2x16xi32>
    %cst_131 = arith.constant 0.000000e+00 : f32
    %256 = vector.shape_cast %253 : vector<2x1xf32> to vector<2x1xf32>
    %257 = vector.broadcast %256 : vector<2x1xf32> to vector<2x16xf32>
    %258 = vector.broadcast %cst_131 : f32 to vector<2x16xf32>
    %259 = arith.select %255, %257, %258 : vector<2x16xi1>, vector<2x16xf32>
    %260 = arith.addf %243, %259 : vector<2x16xf32>
    %c14 = arith.constant 14 : index
    %c0_132 = arith.constant 0 : index
    %c0_133 = arith.constant 0 : index
    %261 = vector.load %arg8[%c14, %c0_132, %c0_133] : memref<16x32x16xf32, #tpu.memory_space<vmem>>, vector<1x32x16xf32>
    %262 = vector.shape_cast %261 : vector<1x32x16xf32> to vector<32x16xf32>
    %cst_134 = arith.constant dense<0.000000e+00> : vector<2x16xf32>
    %263 = tpu.matmul %20, %262, %cst_134 {dimension_numbers = #tpu.dot_dimension_numbers<[1], [0], [0], [1], [0, 0, 1, 1], [], []>} : vector<2x32xf32>, vector<32x16xf32>, vector<2x16xf32> -> vector<2x16xf32>
    %c14_135 = arith.constant 14 : index
    %c0_136 = arith.constant 0 : index
    %c0_137 = arith.constant 0 : index
    %264 = vector.load %arg9[%c14_135, %c0_136, %c0_137] : memref<16x1x16xf32, #tpu.memory_space<vmem>>, vector<1x1x16xf32>
    %265 = vector.shape_cast %264 : vector<1x1x16xf32> to vector<1x16xf32>
    %266 = vector.broadcast %265 : vector<1x16xf32> to vector<2x16xf32>
    %267 = arith.addf %263, %266 : vector<2x16xf32>
    %268 = arith.mulf %267, %0 : vector<2x16xf32>
    %cst_138 = arith.constant dense<0.000000e+00> : vector<2xf32>
    %269 = vector.multi_reduction <add>, %268, %cst_138 [1] : vector<2x16xf32> to vector<2xf32>
    %270 = vector.shape_cast %269 : vector<2xf32> to vector<2x1xf32>
    %c14_i32 = arith.constant 14 : i32
    %271 = vector.broadcast %c14_i32 : i32 to vector<2x16xi32>
    %272 = arith.cmpi eq, %21, %271 : vector<2x16xi32>
    %cst_139 = arith.constant 0.000000e+00 : f32
    %273 = vector.shape_cast %270 : vector<2x1xf32> to vector<2x1xf32>
    %274 = vector.broadcast %273 : vector<2x1xf32> to vector<2x16xf32>
    %275 = vector.broadcast %cst_139 : f32 to vector<2x16xf32>
    %276 = arith.select %272, %274, %275 : vector<2x16xi1>, vector<2x16xf32>
    %277 = arith.addf %260, %276 : vector<2x16xf32>
    %c15 = arith.constant 15 : index
    %c0_140 = arith.constant 0 : index
    %c0_141 = arith.constant 0 : index
    %278 = vector.load %arg8[%c15, %c0_140, %c0_141] : memref<16x32x16xf32, #tpu.memory_space<vmem>>, vector<1x32x16xf32>
    %279 = vector.shape_cast %278 : vector<1x32x16xf32> to vector<32x16xf32>
    %cst_142 = arith.constant dense<0.000000e+00> : vector<2x16xf32>
    %280 = tpu.matmul %20, %279, %cst_142 {dimension_numbers = #tpu.dot_dimension_numbers<[1], [0], [0], [1], [0, 0, 1, 1], [], []>} : vector<2x32xf32>, vector<32x16xf32>, vector<2x16xf32> -> vector<2x16xf32>
    %c15_143 = arith.constant 15 : index
    %c0_144 = arith.constant 0 : index
    %c0_145 = arith.constant 0 : index
    %281 = vector.load %arg9[%c15_143, %c0_144, %c0_145] : memref<16x1x16xf32, #tpu.memory_space<vmem>>, vector<1x1x16xf32>
    %282 = vector.shape_cast %281 : vector<1x1x16xf32> to vector<1x16xf32>
    %283 = vector.broadcast %282 : vector<1x16xf32> to vector<2x16xf32>
    %284 = arith.addf %280, %283 : vector<2x16xf32>
    %285 = arith.mulf %284, %0 : vector<2x16xf32>
    %cst_146 = arith.constant dense<0.000000e+00> : vector<2xf32>
    %286 = vector.multi_reduction <add>, %285, %cst_146 [1] : vector<2x16xf32> to vector<2xf32>
    %287 = vector.shape_cast %286 : vector<2xf32> to vector<2x1xf32>
    %c15_i32 = arith.constant 15 : i32
    %288 = vector.broadcast %c15_i32 : i32 to vector<2x16xi32>
    %289 = arith.cmpi eq, %21, %288 : vector<2x16xi32>
    %cst_147 = arith.constant 0.000000e+00 : f32
    %290 = vector.shape_cast %287 : vector<2x1xf32> to vector<2x1xf32>
    %291 = vector.broadcast %290 : vector<2x1xf32> to vector<2x16xf32>
    %292 = vector.broadcast %cst_147 : f32 to vector<2x16xf32>
    %293 = arith.select %289, %291, %292 : vector<2x16xi1>, vector<2x16xf32>
    %294 = arith.addf %277, %293 : vector<2x16xf32>
    %295 = arith.mulf %294, %294 : vector<2x16xf32>
    %cst_148 = arith.constant dense<0.000000e+00> : vector<2xf32>
    %296 = vector.multi_reduction <add>, %295, %cst_148 [1] : vector<2x16xf32> to vector<2xf32>
    %297 = vector.shape_cast %296 : vector<2xf32> to vector<2x1xf32>
    %cst_149 = arith.constant 1.000000e-24 : f32
    %298 = vector.broadcast %cst_149 : f32 to vector<2x1xf32>
    %299 = arith.maximumf %297, %298 : vector<2x1xf32>
    %300 = math.rsqrt %299 : vector<2x1xf32>
    %301 = vector.broadcast %300 : vector<2x1xf32> to vector<2x16xf32>
    %302 = arith.mulf %294, %301 : vector<2x16xf32>
    %c0_150 = arith.constant 0 : index
    %c0_151 = arith.constant 0 : index
    %303 = vector.load %arg10[%c0_150, %c0_151] : memref<2x16xf32, #tpu.memory_space<vmem>>, vector<2x16xf32>
    tpu.vector_store %arg10[%c0_150, %c0_151], %302 {strides = array<i32>} : memref<2x16xf32, #tpu.memory_space<vmem>>, vector<2x16xf32>,
    return
  }
  func.func @transform_0(%arg0: i32) -> (i32, i32) {
    %c0_i32 = arith.constant 0 : i32
    %c0_i32_0 = arith.constant 0 : i32
    return %arg0, %c0_i32 : i32, i32
  }
  func.func @transform_1(%arg0: i32) -> (i32, i32) {
    %c0_i32 = arith.constant 0 : i32
    %c0_i32_0 = arith.constant 0 : i32
    return %arg0, %c0_i32 : i32, i32
  }
  func.func @transform_2(%arg0: i32) -> (i32, i32) {
    %c0_i32 = arith.constant 0 : i32
    %c0_i32_0 = arith.constant 0 : i32
    %c0_i32_1 = arith.constant 0 : i32
    return %c0_i32, %c0_i32_0 : i32, i32
  }
  func.func @transform_3(%arg0: i32) -> (i32, i32) {
    %c0_i32 = arith.constant 0 : i32
    %c0_i32_0 = arith.constant 0 : i32
    %c0_i32_1 = arith.constant 0 : i32
    return %c0_i32, %c0_i32_0 : i32, i32
  }
  func.func @transform_4(%arg0: i32) -> (i32, i32) {
    %c0_i32 = arith.constant 0 : i32
    %c0_i32_0 = arith.constant 0 : i32
    %c0_i32_1 = arith.constant 0 : i32
    return %c0_i32, %c0_i32_0 : i32, i32
  }
  func.func @transform_5(%arg0: i32) -> (i32, i32) {
    %c0_i32 = arith.constant 0 : i32
    %c0_i32_0 = arith.constant 0 : i32
    %c0_i32_1 = arith.constant 0 : i32
    return %c0_i32, %c0_i32_0 : i32, i32
  }
  func.func @transform_6(%arg0: i32) -> (i32, i32) {
    %c0_i32 = arith.constant 0 : i32
    %c0_i32_0 = arith.constant 0 : i32
    %c0_i32_1 = arith.constant 0 : i32
    return %c0_i32, %c0_i32_0 : i32, i32
  }
  func.func @transform_7(%arg0: i32) -> (i32, i32, i32) {
    %c0_i32 = arith.constant 0 : i32
    %c0_i32_0 = arith.constant 0 : i32
    %c0_i32_1 = arith.constant 0 : i32
    %c0_i32_2 = arith.constant 0 : i32
    return %c0_i32, %c0_i32_0, %c0_i32_1 : i32, i32, i32
  }
  func.func @transform_8(%arg0: i32) -> (i32, i32, i32) {
    %c0_i32 = arith.constant 0 : i32
    %c0_i32_0 = arith.constant 0 : i32
    %c0_i32_1 = arith.constant 0 : i32
    %c0_i32_2 = arith.constant 0 : i32
    return %c0_i32, %c0_i32_0, %c0_i32_1 : i32, i32, i32
  }
  func.func @transform_9(%arg0: i32) -> (i32, i32) {
    %c0_i32 = arith.constant 0 : i32
    %c0_i32_0 = arith.constant 0 : i32
    return %arg0, %c0_i32 : i32, i32
  }
}

</mosaic_0001>

<llo_original>
// kernel: tpu_custom_call.1
$region0: #{tpu_custom_call.1}
  #allocation0 [shape = 'u32[]', space=smem, size = 0x4, offset = 0x4, fixed_abs, tag = 'smem constant byte address 0x4 - core index']
  #allocation1 [shape = 'u32[144,128]{1,0:T(1,128)}', space=vmem, size = 0x12000, scoped, tag = 'internal scratch']
  %s0 = inlined_call_operand.vmem [shape: f32[2,16], index: 0, kind: input, shape index: {}]
  %s1 = inlined_call_operand.vmem [shape: f32[2,8], index: 1, kind: input, shape index: {}]
  %s2 = inlined_call_operand.vmem [shape: f32[8,16], index: 2, kind: input, shape index: {}]
  %s3 = inlined_call_operand.vmem [shape: f32[1,16], index: 3, kind: input, shape index: {}]
  %s4 = inlined_call_operand.vmem [shape: f32[16,32], index: 4, kind: input, shape index: {}]
  %s5 = inlined_call_operand.vmem [shape: f32[16,32], index: 5, kind: input, shape index: {}]
  %s6 = inlined_call_operand.vmem [shape: f32[1,32], index: 6, kind: input, shape index: {}]
  %s7 = inlined_call_operand.vmem [shape: f32[16,32,16], index: 7, kind: input, shape index: {}]
  %s8 = inlined_call_operand.vmem [shape: f32[16,1,16], index: 8, kind: input, shape index: {}]
  %s9 = inlined_call_operand.hbm [shape: f32[2,16], index: 9, kind: output, shape index: {}]
  %s10 = sld [smem:[#allocation0]]
  $region46: #{tpu_custom_call.1} parent=0
    _
  %s12 = ssub.s32 1, %s10
  %s13 = scalar_select 0, %s12, %s10
  $region1: #{tpu_custom_call.1} parent=0
    #allocation2 [shape = 'u8[1024]{0}', space=vmem, size = 0x400, scoped, tag = 'output window, operand 0, single buffered']
    #allocation3 [shape = 's32[1]{0}', space=sflag, size = 0x4, scoped, tag = 'scoped memory for tpu_custom_call.1']
    %14 = vsyncpa [#allocation3], 0
    // Predicated region
    $region2: #{tpu_custom_call.1} parent=1 // pred_check
      _
    $region3: #{tpu_custom_call.1} parent=1 // pred_check_branch
      %16 = sbr.rel (0) target = $region5
    $region4: #{tpu_custom_call.1} parent=1 // pred_region
      _
    $region5: #{tpu_custom_call.1} parent=1 // pred_fallthru
      _
    // Predicated region
    $region6: #{tpu_custom_call.1} parent=1 // pred_check
      _
    $region7: #{tpu_custom_call.1} parent=1 // pred_check_branch
      %18 = sbr.rel (0) target = $region9
    $region8: #{tpu_custom_call.1} parent=1 // pred_region
      _
    $region9: #{tpu_custom_call.1} parent=1 // pred_fallthru
      _
    // Predicated region
    $region10: #{tpu_custom_call.1} parent=1 // pred_check
      _
    $region11: #{tpu_custom_call.1} parent=1 // pred_check_branch
      %20 = sbr.rel (0) target = $region13
    $region12: #{tpu_custom_call.1} parent=1 // pred_region
      _
    $region13: #{tpu_custom_call.1} parent=1 // pred_fallthru
      _
    // Predicated region
    $region14: #{tpu_custom_call.1} parent=1 // pred_check
      _
    $region15: #{tpu_custom_call.1} parent=1 // pred_check_branch
      %22 = sbr.rel (0) target = $region17
    $region16: #{tpu_custom_call.1} parent=1 // pred_region
      _
    $region17: #{tpu_custom_call.1} parent=1 // pred_fallthru
      _
    // Predicated region
    $region18: #{tpu_custom_call.1} parent=1 // pred_check
      _
    $region19: #{tpu_custom_call.1} parent=1 // pred_check_branch
      %24 = sbr.rel (0) target = $region21
    $region20: #{tpu_custom_call.1} parent=1 // pred_region
      _
    $region21: #{tpu_custom_call.1} parent=1 // pred_fallthru
      _
    // Predicated region
    $region22: #{tpu_custom_call.1} parent=1 // pred_check
      _
    $region23: #{tpu_custom_call.1} parent=1 // pred_check_branch
      %26 = sbr.rel (0) target = $region25
    $region24: #{tpu_custom_call.1} parent=1 // pred_region
      _
    $region25: #{tpu_custom_call.1} parent=1 // pred_fallthru
      _
    // Predicated region
    $region26: #{tpu_custom_call.1} parent=1 // pred_check
      _
    $region27: #{tpu_custom_call.1} parent=1 // pred_check_branch
      %28 = sbr.rel (0) target = $region29
    $region28: #{tpu_custom_call.1} parent=1 // pred_region
      _
    $region29: #{tpu_custom_call.1} parent=1 // pred_fallthru
      _
    // Predicated region
    $region30: #{tpu_custom_call.1} parent=1 // pred_check
      _
    $region31: #{tpu_custom_call.1} parent=1 // pred_check_branch
      %30 = sbr.rel (0) target = $region33
    $region32: #{tpu_custom_call.1} parent=1 // pred_region
      _
    $region33: #{tpu_custom_call.1} parent=1 // pred_fallthru
      _
    // Predicated region
    $region34: #{tpu_custom_call.1} parent=1 // pred_check
      _
    $region35: #{tpu_custom_call.1} parent=1 // pred_check_branch
      %32 = sbr.rel (0) target = $region37
    $region36: #{tpu_custom_call.1} parent=1 // pred_region
      _
    $region37: #{tpu_custom_call.1} parent=1 // pred_fallthru
      _
    %v33 = vld [vmem:[%s0] sm:$0x3]
    %v34 = vld [vmem:[%s1] sm:$0x3]
    %v35 = vld [vmem:[%s2] sm:$0xff]
    %v36 = vld [vmem:[%s3] sm:$0x1]
    %v38 = vlaneseq
    %v39 = vshrl.u32 %v38, 7
    %v40 = vsub.s32 0, %v39
    %v41 = vrot.slane %v36, %v40
    %vm43 = vcmask 64512
    %v45 = vsel %vm43, %v34, 0
    %47 = vmatprep.subr.mxu0 0.0
    %48 = vmatpush1.msra.mxu0 %v35
    %49 = vmatprep.subr.mxu0 0.0
    %50 = vmatpush1.msra.mxu0 0.0
    %51 = vmatprep.subr.mxu0 0.0
    %52 = vmatpush1.msra.mxu0 0.0
    %53 = vmatprep.subr.mxu0 0.0
    %54 = vmatpush1.msra.mxu0 0.0
    %55 = vmatprep.subr.mxu0 0.0
    %56 = vmatpush1.msra.mxu0 0.0
    %57 = vmatprep.subr.mxu0 0.0
    %58 = vmatpush1.msra.mxu0 0.0
    %59 = vmatprep.subr.mxu0 0.0
    %60 = vmatpush1.msra.mxu0 0.0
    %61 = vmatprep.subr.mxu0 0.0
    %62 = vmatpush1.msra.mxu0 0.0
    %63 = vmatprep.subr.mxu0 0.0
    %64 = vmatpush1.msra.mxu0 0.0
    %65 = vmatprep.subr.mxu0 0.0
    %66 = vmatpush1.msra.mxu0 0.0
    %67 = vmatprep.subr.mxu0 0.0
    %68 = vmatpush1.msra.mxu0 0.0
    %69 = vmatprep.subr.mxu0 0.0
    %70 = vmatpush1.msra.mxu0 0.0
    %71 = vmatprep.subr.mxu0 0.0
    %72 = vmatpush1.msra.mxu0 0.0
    %73 = vmatprep.subr.mxu0 0.0
    %74 = vmatpush1.msra.mxu0 0.0
    %75 = vmatprep.subr.mxu0 0.0
    %76 = vmatpush1.msra.mxu0 0.0
    %77 = vmatprep.subr.mxu0 0.0
    %78 = vmatpush1.msra.mxu0 0.0
    %79 = vmatprep.subr.mxu0 0.0
    %80 = vmatpush1.msra.mxu0 0.0
    %81 = vmatprep.subr.mxu0 0.0
    %82 = vmatpush1.msra.mxu0 0.0
    %83 = vmatprep.subr.mxu0 0.0
    %84 = vmatpush1.msra.mxu0 0.0
    %85 = vmatprep.subr.mxu0 0.0
    %86 = vmatpush1.msra.mxu0 0.0
    %87 = vmatprep.subr.mxu0 0.0
    %88 = vmatpush1.msra.mxu0 0.0
    %89 = vmatprep.subr.mxu0 0.0
    %90 = vmatpush1.msra.mxu0 0.0
    %91 = vmatprep.subr.mxu0 0.0
    %92 = vmatpush1.msra.mxu0 0.0
    %93 = vmatprep.subr.mxu0 0.0
    %94 = vmatpush1.msra.mxu0 0.0
    %95 = vmatprep.subr.mxu0 0.0
    %96 = vmatpush1.msra.mxu0 0.0
    %97 = vmatprep.subr.mxu0 0.0
    %98 = vmatpush1.msra.mxu0 0.0
    %99 = vmatprep.subr.mxu0 0.0
    %100 = vmatpush1.msra.mxu0 0.0
    %101 = vmatprep.subr.mxu0 0.0
    %102 = vmatpush1.msra.mxu0 0.0
    %103 = vmatprep.subr.mxu0 0.0
    %104 = vmatpush1.msra.mxu0 0.0
    %105 = vmatprep.subr.mxu0 0.0
    %106 = vmatpush1.msra.mxu0 0.0
    %107 = vmatprep.subr.mxu0 0.0
    %108 = vmatpush1.msra.mxu0 0.0
    %109 = vmatprep.subr.mxu0 0.0
    %110 = vmatpush1.msra.mxu0 0.0
    %111 = vmatprep.mubr.f32.mxu0 0.0
    %112 = vmatmul.mubr.f32.gmra.mrb[0].mxu0 %v45
    %v113 = vpop.f32.mrb[0].mxu0
    %v114 = vadd.f32 %v41, %v113
    %v115 = vpop.f32.mrb[0].mxu0
    %116 = vdwg.mxu0
    %v117 = vmax.f32 %v33, 0.0
    %v118 = vmax.f32 %v114, 0.0
    %v119 = vld [vmem:[%s4] sm:$0xff]
    %v120 = vld [vmem:[%s4 + $0x8] sm:$0xff]
    %v121 = vld [vmem:[%s5] sm:$0xff]
    %v122 = vld [vmem:[%s5 + $0x8] sm:$0xff]
    %vm123 = vcmask 130048
    %v125 = vsel %vm123, %v118, 0
    %127 = vmatprep.subr.mxu0 0.0
    %128 = vmatpush1.msra.mxu0 %v121
    %129 = vmatprep.subr.mxu0 0.0
    %130 = vmatpush1.msra.mxu0 %v122
    %131 = vmatprep.subr.mxu0 0.0
    %132 = vmatpush1.msra.mxu0 0.0
    %133 = vmatprep.subr.mxu0 0.0
    %134 = vmatpush1.msra.mxu0 0.0
    %135 = vmatprep.subr.mxu0 0.0
    %136 = vmatpush1.msra.mxu0 0.0
    %137 = vmatprep.subr.mxu0 0.0
    %138 = vmatpush1.msra.mxu0 0.0
    %139 = vmatprep.subr.mxu0 0.0
    %140 = vmatpush1.msra.mxu0 0.0
    %141 = vmatprep.subr.mxu0 0.0
    %142 = vmatpush1.msra.mxu0 0.0
    %143 = vmatprep.subr.mxu0 0.0
    %144 = vmatpush1.msra.mxu0 0.0
    %145 = vmatprep.subr.mxu0 0.0
    %146 = vmatpush1.msra.mxu0 0.0
    %147 = vmatprep.subr.mxu0 0.0
    %148 = vmatpush1.msra.mxu0 0.0
    %149 = vmatprep.subr.mxu0 0.0
    %150 = vmatpush1.msra.mxu0 0.0
    %151 = vmatprep.subr.mxu0 0.0
    %152 = vmatpush1.msra.mxu0 0.0
    %153 = vmatprep.subr.mxu0 0.0
    %154 = vmatpush1.msra.mxu0 0.0
    %155 = vmatprep.subr.mxu0 0.0
    %156 = vmatpush1.msra.mxu0 0.0
    %157 = vmatprep.subr.mxu0 0.0
    %158 = vmatpush1.msra.mxu0 0.0
    %159 = vmatprep.subr.mxu0 0.0
    %160 = vmatpush1.msra.mxu0 0.0
    %161 = vmatprep.subr.mxu0 0.0
    %162 = vmatpush1.msra.mxu0 0.0
    %163 = vmatprep.subr.mxu0 0.0
    %164 = vmatpush1.msra.mxu0 0.0
    %165 = vmatprep.subr.mxu0 0.0
    %166 = vmatpush1.msra.mxu0 0.0
    %167 = vmatprep.subr.mxu0 0.0
    %168 = vmatpush1.msra.mxu0 0.0
    %169 = vmatprep.subr.mxu0 0.0
    %170 = vmatpush1.msra.mxu0 0.0
    %171 = vmatprep.subr.mxu0 0.0
    %172 = vmatpush1.msra.mxu0 0.0
    %173 = vmatprep.subr.mxu0 0.0
    %174 = vmatpush1.msra.mxu0 0.0
    %175 = vmatprep.subr.mxu0 0.0
    %176 = vmatpush1.msra.mxu0 0.0
    %177 = vmatprep.subr.mxu0 0.0
    %178 = vmatpush1.msra.mxu0 0.0
    %179 = vmatprep.subr.mxu0 0.0
    %180 = vmatpush1.msra.mxu0 0.0
    %181 = vmatprep.subr.mxu0 0.0
    %182 = vmatpush1.msra.mxu0 0.0
    %183 = vmatprep.subr.mxu0 0.0
    %184 = vmatpush1.msra.mxu0 0.0
    %185 = vmatprep.subr.mxu0 0.0
    %186 = vmatpush1.msra.mxu0 0.0
    %187 = vmatprep.subr.mxu0 0.0
    %188 = vmatpush1.msra.mxu0 0.0
    %189 = vmatprep.subr.mxu0 0.0
    %190 = vmatpush1.msra.mxu0 0.0
    %191 = vmatprep.mubr.f32.mxu0 0.0
    %192 = vmatmul.mubr.f32.gmra.mrb[0].mxu0 %v125
    %v193 = vpop.f32.mrb[0].mxu0
    %v194 = vadd.f32 0.0, %v193
    %v195 = vpop.f32.mrb[0].mxu0
    %196 = vdwg.mxu0
    %v198 = vsel %vm123, %v117, 0
    %200 = vmatprep.subr.mxu0 0.0
    %201 = vmatpush1.msra.mxu0 %v119
    %202 = vmatprep.subr.mxu0 0.0
    %203 = vmatpush1.msra.mxu0 %v120
    %204 = vmatprep.subr.mxu0 0.0
    %205 = vmatpush1.msra.mxu0 0.0
    %206 = vmatprep.subr.mxu0 0.0
    %207 = vmatpush1.msra.mxu0 0.0
    %208 = vmatprep.subr.mxu0 0.0
    %209 = vmatpush1.msra.mxu0 0.0
    %210 = vmatprep.subr.mxu0 0.0
    %211 = vmatpush1.msra.mxu0 0.0
    %212 = vmatprep.subr.mxu0 0.0
    %213 = vmatpush1.msra.mxu0 0.0
    %214 = vmatprep.subr.mxu0 0.0
    %215 = vmatpush1.msra.mxu0 0.0
    %216 = vmatprep.subr.mxu0 0.0
    %217 = vmatpush1.msra.mxu0 0.0
    %218 = vmatprep.subr.mxu0 0.0
    %219 = vmatpush1.msra.mxu0 0.0
    %220 = vmatprep.subr.mxu0 0.0
    %221 = vmatpush1.msra.mxu0 0.0
    %222 = vmatprep.subr.mxu0 0.0
    %223 = vmatpush1.msra.mxu0 0.0
    %224 = vmatprep.subr.mxu0 0.0
    %225 = vmatpush1.msra.mxu0 0.0
    %226 = vmatprep.subr.mxu0 0.0
    %227 = vmatpush1.msra.mxu0 0.0
    %228 = vmatprep.subr.mxu0 0.0
    %229 = vmatpush1.msra.mxu0 0.0
    %230 = vmatprep.subr.mxu0 0.0
    %231 = vmatpush1.msra.mxu0 0.0
    %232 = vmatprep.subr.mxu0 0.0
    %233 = vmatpush1.msra.mxu0 0.0
    %234 = vmatprep.subr.mxu0 0.0
    %235 = vmatpush1.msra.mxu0 0.0
    %236 = vmatprep.subr.mxu0 0.0
    %237 = vmatpush1.msra.mxu0 0.0
    %238 = vmatprep.subr.mxu0 0.0
    %239 = vmatpush1.msra.mxu0 0.0
    %240 = vmatprep.subr.mxu0 0.0
    %241 = vmatpush1.msra.mxu0 0.0
    %242 = vmatprep.subr.mxu0 0.0
    %243 = vmatpush1.msra.mxu0 0.0
    %244 = vmatprep.subr.mxu0 0.0
    %245 = vmatpush1.msra.mxu0 0.0
    %246 = vmatprep.subr.mxu0 0.0
    %247 = vmatpush1.msra.mxu0 0.0
    %248 = vmatprep.subr.mxu0 0.0
    %249 = vmatpush1.msra.mxu0 0.0
    %250 = vmatprep.subr.mxu0 0.0
    %251 = vmatpush1.msra.mxu0 0.0
    %252 = vmatprep.subr.mxu0 0.0
    %253 = vmatpush1.msra.mxu0 0.0
    %254 = vmatprep.subr.mxu0 0.0
    %255 = vmatpush1.msra.mxu0 0.0
    %256 = vmatprep.subr.mxu0 0.0
    %257 = vmatpush1.msra.mxu0 0.0
    %258 = vmatprep.subr.mxu0 0.0
    %259 = vmatpush1.msra.mxu0 0.0
    %260 = vmatprep.subr.mxu0 0.0
    %261 = vmatpush1.msra.mxu0 0.0
    %262 = vmatprep.subr.mxu0 0.0
    %263 = vmatpush1.msra.mxu0 0.0
    %264 = vmatprep.mubr.f32.mxu0 0.0
    %265 = vmatmul.mubr.f32.gmra.mrb[0].mxu0 %v198
    %v266 = vpop.f32.mrb[0].mxu0
    %v267 = vadd.f32 %v194, %v266
    %v268 = vpop.f32.mrb[0].mxu0
    %269 = vdwg.mxu0
    %v270 = vld [vmem:[%s6] sm:$0x1]
    %v272 = vlaneseq
    %v273 = vshrl.u32 %v272, 7
    %v274 = vsub.s32 0, %v273
    %v275 = vrot.slane %v270, %v274
    %v277 = vadd.f32 %v267, %v275
    %v278 = vmax.f32 %v277, 0.0
    %v279 = vlaneseq
    %v280 = vand.u32 %v279, 127
    %v281 = vld [vmem:[%s7] sm:$0xff]
    %v282 = vld [vmem:[%s7 + $0x8] sm:$0xff]
    %v283 = vld [vmem:[%s7 + $0x10] sm:$0xff]
    %v284 = vld [vmem:[%s7 + $0x18] sm:$0xff]
    %v285 = vld [vmem:[%s8] sm:$0x1]
    %v287 = vlaneseq
    %v288 = vshrl.u32 %v287, 7
    %v289 = vsub.s32 0, %v288
    %v290 = vrot.slane %v285, %v289
    %vm292 = vcmask 261120
    %v294 = vsel %vm292, %v278, 0
    %296 = vmatprep.subr.mxu0 0.0
    %297 = vmatpush1.msra.mxu0 %v281
    %298 = vmatprep.subr.mxu0 0.0
    %299 = vmatpush1.msra.mxu0 %v282
    %300 = vmatprep.subr.mxu0 0.0
    %301 = vmatpush1.msra.mxu0 %v283
    %302 = vmatprep.subr.mxu0 0.0
    %303 = vmatpush1.msra.mxu0 %v284
    %304 = vmatprep.subr.mxu0 0.0
    %305 = vmatpush1.msra.mxu0 0.0
    %306 = vmatprep.subr.mxu0 0.0
    %307 = vmatpush1.msra.mxu0 0.0
    %308 = vmatprep.subr.mxu0 0.0
    %309 = vmatpush1.msra.mxu0 0.0
    %310 = vmatprep.subr.mxu0 0.0
    %311 = vmatpush1.msra.mxu0 0.0
    %312 = vmatprep.subr.mxu0 0.0
    %313 = vmatpush1.msra.mxu0 0.0
    %314 = vmatprep.subr.mxu0 0.0
    %315 = vmatpush1.msra.mxu0 0.0
    %316 = vmatprep.subr.mxu0 0.0
    %317 = vmatpush1.msra.mxu0 0.0
    %318 = vmatprep.subr.mxu0 0.0
    %319 = vmatpush1.msra.mxu0 0.0
    %320 = vmatprep.subr.mxu0 0.0
    %321 = vmatpush1.msra.mxu0 0.0
    %322 = vmatprep.subr.mxu0 0.0
    %323 = vmatpush1.msra.mxu0 0.0
    %324 = vmatprep.subr.mxu0 0.0
    %325 = vmatpush1.msra.mxu0 0.0
    %326 = vmatprep.subr.mxu0 0.0
    %327 = vmatpush1.msra.mxu0 0.0
    %328 = vmatprep.subr.mxu0 0.0
    %329 = vmatpush1.msra.mxu0 0.0
    %330 = vmatprep.subr.mxu0 0.0
    %331 = vmatpush1.msra.mxu0 0.0
    %332 = vmatprep.subr.mxu0 0.0
    %333 = vmatpush1.msra.mxu0 0.0
    %334 = vmatprep.subr.mxu0 0.0
    %335 = vmatpush1.msra.mxu0 0.0
    %336 = vmatprep.subr.mxu0 0.0
    %337 = vmatpush1.msra.mxu0 0.0
    %338 = vmatprep.subr.mxu0 0.0
    %339 = vmatpush1.msra.mxu0 0.0
    %340 = vmatprep.subr.mxu0 0.0
    %341 = vmatpush1.msra.mxu0 0.0
    %342 = vmatprep.subr.mxu0 0.0
    %343 = vmatpush1.msra.mxu0 0.0
    %344 = vmatprep.subr.mxu0 0.0
    %345 = vmatpush1.msra.mxu0 0.0
    %346 = vmatprep.subr.mxu0 0.0
    %347 = vmatpush1.msra.mxu0 0.0
    %348 = vmatprep.subr.mxu0 0.0
    %349 = vmatpush1.msra.mxu0 0.0
    %350 = vmatprep.subr.mxu0 0.0
    %351 = vmatpush1.msra.mxu0 0.0
    %352 = vmatprep.subr.mxu0 0.0
    %353 = vmatpush1.msra.mxu0 0.0
    %354 = vmatprep.subr.mxu0 0.0
    %355 = vmatpush1.msra.mxu0 0.0
    %356 = vmatprep.subr.mxu0 0.0
    %357 = vmatpush1.msra.mxu0 0.0
    %358 = vmatprep.subr.mxu0 0.0
    %359 = vmatpush1.msra.mxu0 0.0
    %360 = vmatprep.mubr.f32.mxu0 0.0
    %361 = vmatmul.mubr.f32.gmra.mrb[0].mxu0 %v294
    %v362 = vpop.f32.mrb[0].mxu0
    %v363 = vadd.f32 %v290, %v362
    %v364 = vpop.f32.mrb[0].mxu0
    %365 = vdwg.mxu0
    %v366 = vmul.f32 %v363, %v33
    %vm367 = vcmask 123904
    %v368 = vsel %vm367, %v366, 0.0
    %369 = vadd.xlane.f32.xlu0 %v368
    %v370 = vpop.xlane.xlu0 %369
    %vm371 = vcmp.eq.s32.totalorder %v280, 0
    %v372 = vsel %vm371, %v370, 0.0
    %v373 = vadd.f32 %v372, 0.0
    %s374 = scalar_lea.vmem %s7, 32
    %v375 = vld [vmem:[%s374] sm:$0xff]
    %v376 = vld [vmem:[%s374 + $0x8] sm:$0xff]
    %v377 = vld [vmem:[%s374 + $0x10] sm:$0xff]
    %v378 = vld [vmem:[%s374 + $0x18] sm:$0xff]
    %s379 = scalar_lea.vmem %s8, 1
    %v380 = vld [vmem:[%s379] sm:$0x1]
    %v382 = vlaneseq
    %v383 = vshrl.u32 %v382, 7
    %v384 = vsub.s32 0, %v383
    %v385 = vrot.slane %v380, %v384
    %387 = vmatprep.subr.mxu0 0.0
    %388 = vmatpush1.msra.mxu0 %v375
    %389 = vmatprep.subr.mxu0 0.0
    %390 = vmatpush1.msra.mxu0 %v376
    %391 = vmatprep.subr.mxu0 0.0
    %392 = vmatpush1.msra.mxu0 %v377
    %393 = vmatprep.subr.mxu0 0.0
    %394 = vmatpush1.msra.mxu0 %v378
    %395 = vmatprep.subr.mxu0 0.0
    %396 = vmatpush1.msra.mxu0 0.0
    %397 = vmatprep.subr.mxu0 0.0
    %398 = vmatpush1.msra.mxu0 0.0
    %399 = vmatprep.subr.mxu0 0.0
    %400 = vmatpush1.msra.mxu0 0.0
    %401 = vmatprep.subr.mxu0 0.0
    %402 = vmatpush1.msra.mxu0 0.0
    %403 = vmatprep.subr.mxu0 0.0
    %404 = vmatpush1.msra.mxu0 0.0
    %405 = vmatprep.subr.mxu0 0.0
    %406 = vmatpush1.msra.mxu0 0.0
    %407 = vmatprep.subr.mxu0 0.0
    %408 = vmatpush1.msra.mxu0 0.0
    %409 = vmatprep.subr.mxu0 0.0
    %410 = vmatpush1.msra.mxu0 0.0
    %411 = vmatprep.subr.mxu0 0.0
    %412 = vmatpush1.msra.mxu0 0.0
    %413 = vmatprep.subr.mxu0 0.0
    %414 = vmatpush1.msra.mxu0 0.0
    %415 = vmatprep.subr.mxu0 0.0
    %416 = vmatpush1.msra.mxu0 0.0
    %417 = vmatprep.subr.mxu0 0.0
    %418 = vmatpush1.msra.mxu0 0.0
    %419 = vmatprep.subr.mxu0 0.0
    %420 = vmatpush1.msra.mxu0 0.0
    %421 = vmatprep.subr.mxu0 0.0
    %422 = vmatpush1.msra.mxu0 0.0
    %423 = vmatprep.subr.mxu0 0.0
    %424 = vmatpush1.msra.mxu0 0.0
    %425 = vmatprep.subr.mxu0 0.0
    %426 = vmatpush1.msra.mxu0 0.0
    %427 = vmatprep.subr.mxu0 0.0
    %428 = vmatpush1.msra.mxu0 0.0
    %429 = vmatprep.subr.mxu0 0.0
    %430 = vmatpush1.msra.mxu0 0.0
    %431 = vmatprep.subr.mxu0 0.0
    %432 = vmatpush1.msra.mxu0 0.0
    %433 = vmatprep.subr.mxu0 0.0
    %434 = vmatpush1.msra.mxu0 0.0
    %435 = vmatprep.subr.mxu0 0.0
    %436 = vmatpush1.msra.mxu0 0.0
    %437 = vmatprep.subr.mxu0 0.0
    %438 = vmatpush1.msra.mxu0 0.0
    %439 = vmatprep.subr.mxu0 0.0
    %440 = vmatpush1.msra.mxu0 0.0
    %441 = vmatprep.subr.mxu0 0.0
    %442 = vmatpush1.msra.mxu0 0.0
    %443 = vmatprep.subr.mxu0 0.0
    %444 = vmatpush1.msra.mxu0 0.0
    %445 = vmatprep.subr.mxu0 0.0
    %446 = vmatpush1.msra.mxu0 0.0
    %447 = vmatprep.subr.mxu0 0.0
    %448 = vmatpush1.msra.mxu0 0.0
    %449 = vmatprep.subr.mxu0 0.0
    %450 = vmatpush1.msra.mxu0 0.0
    %451 = vmatprep.mubr.f32.mxu0 0.0
    %452 = vmatmul.mubr.f32.gmra.mrb[0].mxu0 %v294
    %v453 = vpop.f32.mrb[0].mxu0
    %v454 = vadd.f32 %v385, %v453
    %v455 = vpop.f32.mrb[0].mxu0
    %456 = vdwg.mxu0
    %v457 = vmul.f32 %v454, %v33
    %v458 = vsel %vm367, %v457, 0.0
    %459 = vadd.xlane.f32.xlu0 %v458
    %v460 = vpop.xlane.xlu0 %459
    %vm461 = vcmp.eq.s32.totalorder %v280, 1
    %v462 = vsel %vm461, %v460, 0.0
    %v463 = vadd.f32 %v373, %v462
    %s464 = scalar_lea.vmem %s7, 64
    %v465 = vld [vmem:[%s464] sm:$0xff]
    %v466 = vld [vmem:[%s464 + $0x8] sm:$0xff]
    %v467 = vld [vmem:[%s464 + $0x10] sm:$0xff]
    %v468 = vld [vmem:[%s464 + $0x18] sm:$0xff]
    %s469 = scalar_lea.vmem %s8, 2
    %v470 = vld [vmem:[%s469] sm:$0x1]
    %v472 = vlaneseq
    %v473 = vshrl.u32 %v472, 7
    %v474 = vsub.s32 0, %v473
    %v475 = vrot.slane %v470, %v474
    %477 = vmatprep.subr.mxu0 0.0
    %478 = vmatpush1.msra.mxu0 %v465
    %479 = vmatprep.subr.mxu0 0.0
    %480 = vmatpush1.msra.mxu0 %v466
    %481 = vmatprep.subr.mxu0 0.0
    %482 = vmatpush1.msra.mxu0 %v467
    %483 = vmatprep.subr.mxu0 0.0
    %484 = vmatpush1.msra.mxu0 %v468
    %485 = vmatprep.subr.mxu0 0.0
    %486 = vmatpush1.msra.mxu0 0.0
    %487 = vmatprep.subr.mxu0 0.0
    %488 = vmatpush1.msra.mxu0 0.0
    %489 = vmatprep.subr.mxu0 0.0
    %490 = vmatpush1.msra.mxu0 0.0
    %491 = vmatprep.subr.mxu0 0.0
    %492 = vmatpush1.msra.mxu0 0.0
    %493 = vmatprep.subr.mxu0 0.0
    %494 = vmatpush1.msra.mxu0 0.0
    %495 = vmatprep.subr.mxu0 0.0
    %496 = vmatpush1.msra.mxu0 0.0
    %497 = vmatprep.subr.mxu0 0.0
    %498 = vmatpush1.msra.mxu0 0.0
    %499 = vmatprep.subr.mxu0 0.0
    %500 = vmatpush1.msra.mxu0 0.0
    %501 = vmatprep.subr.mxu0 0.0
    %502 = vmatpush1.msra.mxu0 0.0
    %503 = vmatprep.subr.mxu0 0.0
    %504 = vmatpush1.msra.mxu0 0.0
    %505 = vmatprep.subr.mxu0 0.0
    %506 = vmatpush1.msra.mxu0 0.0
    %507 = vmatprep.subr.mxu0 0.0
    %508 = vmatpush1.msra.mxu0 0.0
    %509 = vmatprep.subr.mxu0 0.0
    %510 = vmatpush1.msra.mxu0 0.0
    %511 = vmatprep.subr.mxu0 0.0
    %512 = vmatpush1.msra.mxu0 0.0
    %513 = vmatprep.subr.mxu0 0.0
    %514 = vmatpush1.msra.mxu0 0.0
    %515 = vmatprep.subr.mxu0 0.0
    %516 = vmatpush1.msra.mxu0 0.0
    %517 = vmatprep.subr.mxu0 0.0
    %518 = vmatpush1.msra.mxu0 0.0
    %519 = vmatprep.subr.mxu0 0.0
    %520 = vmatpush1.msra.mxu0 0.0
    %521 = vmatprep.subr.mxu0 0.0
    %522 = vmatpush1.msra.mxu0 0.0
    %523 = vmatprep.subr.mxu0 0.0
    %524 = vmatpush1.msra.mxu0 0.0
    %525 = vmatprep.subr.mxu0 0.0
    %526 = vmatpush1.msra.mxu0 0.0
    %527 = vmatprep.subr.mxu0 0.0
    %528 = vmatpush1.msra.mxu0 0.0
    %529 = vmatprep.subr.mxu0 0.0
    %530 = vmatpush1.msra.mxu0 0.0
    %531 = vmatprep.subr.mxu0 0.0
    %532 = vmatpush1.msra.mxu0 0.0
    %533 = vmatprep.subr.mxu0 0.0
    %534 = vmatpush1.msra.mxu0 0.0
    %535 = vmatprep.subr.mxu0 0.0
    %536 = vmatpush1.msra.mxu0 0.0
    %537 = vmatprep.subr.mxu0 0.0
    %538 = vmatpush1.msra.mxu0 0.0
    %539 = vmatprep.subr.mxu0 0.0
    %540 = vmatpush1.msra.mxu0 0.0
    %541 = vmatprep.mubr.f32.mxu0 0.0
    %542 = vmatmul.mubr.f32.gmra.mrb[0].mxu0 %v294
    %v543 = vpop.f32.mrb[0].mxu0
    %v544 = vadd.f32 %v475, %v543
    %v545 = vpop.f32.mrb[0].mxu0
    %546 = vdwg.mxu0
    %v547 = vmul.f32 %v544, %v33
    %v548 = vsel %vm367, %v547, 0.0
    %549 = vadd.xlane.f32.xlu0 %v548
    %v550 = vpop.xlane.xlu0 %549
    %vm551 = vcmp.eq.s32.totalorder %v280, 2
    %v552 = vsel %vm551, %v550, 0.0
    %v553 = vadd.f32 %v463, %v552
    %s554 = scalar_lea.vmem %s7, 96
    %v555 = vld [vmem:[%s554] sm:$0xff]
    %v556 = vld [vmem:[%s554 + $0x8] sm:$0xff]
    %v557 = vld [vmem:[%s554 + $0x10] sm:$0xff]
    %v558 = vld [vmem:[%s554 + $0x18] sm:$0xff]
    %s559 = scalar_lea.vmem %s8, 3
    %v560 = vld [vmem:[%s559] sm:$0x1]
    %v562 = vlaneseq
    %v563 = vshrl.u32 %v562, 7
    %v564 = vsub.s32 0, %v563
    %v565 = vrot.slane %v560, %v564
    %567 = vmatprep.subr.mxu0 0.0
    %568 = vmatpush1.msra.mxu0 %v555
    %569 = vmatprep.subr.mxu0 0.0
    %570 = vmatpush1.msra.mxu0 %v556
    %571 = vmatprep.subr.mxu0 0.0
    %572 = vmatpush1.msra.mxu0 %v557
    %573 = vmatprep.subr.mxu0 0.0
    %574 = vmatpush1.msra.mxu0 %v558
    %575 = vmatprep.subr.mxu0 0.0
    %576 = vmatpush1.msra.mxu0 0.0
    %577 = vmatprep.subr.mxu0 0.0
    %578 = vmatpush1.msra.mxu0 0.0
    %579 = vmatprep.subr.mxu0 0.0
    %580 = vmatpush1.msra.mxu0 0.0
    %581 = vmatprep.subr.mxu0 0.0
    %582 = vmatpush1.msra.mxu0 0.0
    %583 = vmatprep.subr.mxu0 0.0
    %584 = vmatpush1.msra.mxu0 0.0
    %585 = vmatprep.subr.mxu0 0.0
    %586 = vmatpush1.msra.mxu0 0.0
    %587 = vmatprep.subr.mxu0 0.0
    %588 = vmatpush1.msra.mxu0 0.0
    %589 = vmatprep.subr.mxu0 0.0
    %590 = vmatpush1.msra.mxu0 0.0
    %591 = vmatprep.subr.mxu0 0.0
    %592 = vmatpush1.msra.mxu0 0.0
    %593 = vmatprep.subr.mxu0 0.0
    %594 = vmatpush1.msra.mxu0 0.0
    %595 = vmatprep.subr.mxu0 0.0
    %596 = vmatpush1.msra.mxu0 0.0
    %597 = vmatprep.subr.mxu0 0.0
    %598 = vmatpush1.msra.mxu0 0.0
    %599 = vmatprep.subr.mxu0 0.0
    %600 = vmatpush1.msra.mxu0 0.0
    %601 = vmatprep.subr.mxu0 0.0
    %602 = vmatpush1.msra.mxu0 0.0
    %603 = vmatprep.subr.mxu0 0.0
    %604 = vmatpush1.msra.mxu0 0.0
    %605 = vmatprep.subr.mxu0 0.0
    %606 = vmatpush1.msra.mxu0 0.0
    %607 = vmatprep.subr.mxu0 0.0
    %608 = vmatpush1.msra.mxu0 0.0
    %609 = vmatprep.subr.mxu0 0.0
    %610 = vmatpush1.msra.mxu0 0.0
    %611 = vmatprep.subr.mxu0 0.0
    %612 = vmatpush1.msra.mxu0 0.0
    %613 = vmatprep.subr.mxu0 0.0
    %614 = vmatpush1.msra.mxu0 0.0
    %615 = vmatprep.subr.mxu0 0.0
    %616 = vmatpush1.msra.mxu0 0.0
    %617 = vmatprep.subr.mxu0 0.0
    %618 = vmatpush1.msra.mxu0 0.0
    %619 = vmatprep.subr.mxu0 0.0
    %620 = vmatpush1.msra.mxu0 0.0
    %621 = vmatprep.subr.mxu0 0.0
    %622 = vmatpush1.msra.mxu0 0.0
    %623 = vmatprep.subr.mxu0 0.0
    %624 = vmatpush1.msra.mxu0 0.0
    %625 = vmatprep.subr.mxu0 0.0
    %626 = vmatpush1.msra.mxu0 0.0
    %627 = vmatprep.subr.mxu0 0.0
    %628 = vmatpush1.msra.mxu0 0.0
    %629 = vmatprep.subr.mxu0 0.0
    %630 = vmatpush1.msra.mxu0 0.0
    %631 = vmatprep.mubr.f32.mxu0 0.0
    %632 = vmatmul.mubr.f32.gmra.mrb[0].mxu0 %v294
    %v633 = vpop.f32.mrb[0].mxu0
    %v634 = vadd.f32 %v565, %v633
    %v635 = vpop.f32.mrb[0].mxu0
    %636 = vdwg.mxu0
    %v637 = vmul.f32 %v634, %v33
    %v638 = vsel %vm367, %v637, 0.0
    %639 = vadd.xlane.f32.xlu0 %v638
    %v640 = vpop.xlane.xlu0 %639
    %vm641 = vcmp.eq.s32.totalorder %v280, 3
    %v642 = vsel %vm641, %v640, 0.0
    %v643 = vadd.f32 %v553, %v642
    %s644 = scalar_lea.vmem %s7, 128
    %v645 = vld [vmem:[%s644] sm:$0xff]
    %v646 = vld [vmem:[%s644 + $0x8] sm:$0xff]
    %v647 = vld [vmem:[%s644 + $0x10] sm:$0xff]
    %v648 = vld [vmem:[%s644 + $0x18] sm:$0xff]
    %s649 = scalar_lea.vmem %s8, 4
    %v650 = vld [vmem:[%s649] sm:$0x1]
    %v652 = vlaneseq
    %v653 = vshrl.u32 %v652, 7
    %v654 = vsub.s32 0, %v653
    %v655 = vrot.slane %v650, %v654
    %657 = vmatprep.subr.mxu0 0.0
    %658 = vmatpush1.msra.mxu0 %v645
    %659 = vmatprep.subr.mxu0 0.0
    %660 = vmatpush1.msra.mxu0 %v646
    %661 = vmatprep.subr.mxu0 0.0
    %662 = vmatpush1.msra.mxu0 %v647
    %663 = vmatprep.subr.mxu0 0.0
    %664 = vmatpush1.msra.mxu0 %v648
    %665 = vmatprep.subr.mxu0 0.0
    %666 = vmatpush1.msra.mxu0 0.0
    %667 = vmatprep.subr.mxu0 0.0
    %668 = vmatpush1.msra.mxu0 0.0
    %669 = vmatprep.subr.mxu0 0.0
    %670 = vmatpush1.msra.mxu0 0.0
    %671 = vmatprep.subr.mxu0 0.0
    %672 = vmatpush1.msra.mxu0 0.0
    %673 = vmatprep.subr.mxu0 0.0
    %674 = vmatpush1.msra.mxu0 0.0
    %675 = vmatprep.subr.mxu0 0.0
    %676 = vmatpush1.msra.mxu0 0.0
    %677 = vmatprep.subr.mxu0 0.0
    %678 = vmatpush1.msra.mxu0 0.0
    %679 = vmatprep.subr.mxu0 0.0
    %680 = vmatpush1.msra.mxu0 0.0
    %681 = vmatprep.subr.mxu0 0.0
    %682 = vmatpush1.msra.mxu0 0.0
    %683 = vmatprep.subr.mxu0 0.0
    %684 = vmatpush1.msra.mxu0 0.0
    %685 = vmatprep.subr.mxu0 0.0
    %686 = vmatpush1.msra.mxu0 0.0
    %687 = vmatprep.subr.mxu0 0.0
    %688 = vmatpush1.msra.mxu0 0.0
    %689 = vmatprep.subr.mxu0 0.0
    %690 = vmatpush1.msra.mxu0 0.0
    %691 = vmatprep.subr.mxu0 0.0
    %692 = vmatpush1.msra.mxu0 0.0
    %693 = vmatprep.subr.mxu0 0.0
    %694 = vmatpush1.msra.mxu0 0.0
    %695 = vmatprep.subr.mxu0 0.0
    %696 = vmatpush1.msra.mxu0 0.0
    %697 = vmatprep.subr.mxu0 0.0
    %698 = vmatpush1.msra.mxu0 0.0
    %699 = vmatprep.subr.mxu0 0.0
    %700 = vmatpush1.msra.mxu0 0.0
    %701 = vmatprep.subr.mxu0 0.0
    %702 = vmatpush1.msra.mxu0 0.0
    %703 = vmatprep.subr.mxu0 0.0
    %704 = vmatpush1.msra.mxu0 0.0
    %705 = vmatprep.subr.mxu0 0.0
    %706 = vmatpush1.msra.mxu0 0.0
    %707 = vmatprep.subr.mxu0 0.0
    %708 = vmatpush1.msra.mxu0 0.0
    %709 = vmatprep.subr.mxu0 0.0
    %710 = vmatpush1.msra.mxu0 0.0
    %711 = vmatprep.subr.mxu0 0.0
    %712 = vmatpush1.msra.mxu0 0.0
    %713 = vmatprep.subr.mxu0 0.0
    %714 = vmatpush1.msra.mxu0 0.0
    %715 = vmatprep.subr.mxu0 0.0
    %716 = vmatpush1.msra.mxu0 0.0
    %717 = vmatprep.subr.mxu0 0.0
    %718 = vmatpush1.msra.mxu0 0.0
    %719 = vmatprep.subr.mxu0 0.0
    %720 = vmatpush1.msra.mxu0 0.0
    %721 = vmatprep.mubr.f32.mxu0 0.0
    %722 = vmatmul.mubr.f32.gmra.mrb[0].mxu0 %v294
    %v723 = vpop.f32.mrb[0].mxu0
    %v724 = vadd.f32 %v655, %v723
    %v725 = vpop.f32.mrb[0].mxu0
    %726 = vdwg.mxu0
    %v727 = vmul.f32 %v724, %v33
    %v728 = vsel %vm367, %v727, 0.0
    %729 = vadd.xlane.f32.xlu0 %v728
    %v730 = vpop.xlane.xlu0 %729
    %vm731 = vcmp.eq.s32.totalorder %v280, 4
    %v732 = vsel %vm731, %v730, 0.0
    %v733 = vadd.f32 %v643, %v732
    %s734 = scalar_lea.vmem %s7, 160
    %v735 = vld [vmem:[%s734] sm:$0xff]
    %v736 = vld [vmem:[%s734 + $0x8] sm:$0xff]
    %v737 = vld [vmem:[%s734 + $0x10] sm:$0xff]
    %v738 = vld [vmem:[%s734 + $0x18] sm:$0xff]
    %s739 = scalar_lea.vmem %s8, 5
    %v740 = vld [vmem:[%s739] sm:$0x1]
    %v742 = vlaneseq
    %v743 = vshrl.u32 %v742, 7
    %v744 = vsub.s32 0, %v743
    %v745 = vrot.slane %v740, %v744
    %747 = vmatprep.subr.mxu0 0.0
    %748 = vmatpush1.msra.mxu0 %v735
    %749 = vmatprep.subr.mxu0 0.0
    %750 = vmatpush1.msra.mxu0 %v736
    %751 = vmatprep.subr.mxu0 0.0
    %752 = vmatpush1.msra.mxu0 %v737
    %753 = vmatprep.subr.mxu0 0.0
    %754 = vmatpush1.msra.mxu0 %v738
    %755 = vmatprep.subr.mxu0 0.0
    %756 = vmatpush1.msra.mxu0 0.0
    %757 = vmatprep.subr.mxu0 0.0
    %758 = vmatpush1.msra.mxu0 0.0
    %759 = vmatprep.subr.mxu0 0.0
    %760 = vmatpush1.msra.mxu0 0.0
    %761 = vmatprep.subr.mxu0 0.0
    %762 = vmatpush1.msra.mxu0 0.0
    %763 = vmatprep.subr.mxu0 0.0
    %764 = vmatpush1.msra.mxu0 0.0
    %765 = vmatprep.subr.mxu0 0.0
    %766 = vmatpush1.msra.mxu0 0.0
    %767 = vmatprep.subr.mxu0 0.0
    %768 = vmatpush1.msra.mxu0 0.0
    %769 = vmatprep.subr.mxu0 0.0
    %770 = vmatpush1.msra.mxu0 0.0
    %771 = vmatprep.subr.mxu0 0.0
    %772 = vmatpush1.msra.mxu0 0.0
    %773 = vmatprep.subr.mxu0 0.0
    %774 = vmatpush1.msra.mxu0 0.0
    %775 = vmatprep.subr.mxu0 0.0
    %776 = vmatpush1.msra.mxu0 0.0
    %777 = vmatprep.subr.mxu0 0.0
    %778 = vmatpush1.msra.mxu0 0.0
    %779 = vmatprep.subr.mxu0 0.0
    %780 = vmatpush1.msra.mxu0 0.0
    %781 = vmatprep.subr.mxu0 0.0
    %782 = vmatpush1.msra.mxu0 0.0
    %783 = vmatprep.subr.mxu0 0.0
    %784 = vmatpush1.msra.mxu0 0.0
    %785 = vmatprep.subr.mxu0 0.0
    %786 = vmatpush1.msra.mxu0 0.0
    %787 = vmatprep.subr.mxu0 0.0
    %788 = vmatpush1.msra.mxu0 0.0
    %789 = vmatprep.subr.mxu0 0.0
    %790 = vmatpush1.msra.mxu0 0.0
    %791 = vmatprep.subr.mxu0 0.0
    %792 = vmatpush1.msra.mxu0 0.0
    %793 = vmatprep.subr.mxu0 0.0
    %794 = vmatpush1.msra.mxu0 0.0
    %795 = vmatprep.subr.mxu0 0.0
    %796 = vmatpush1.msra.mxu0 0.0
    %797 = vmatprep.subr.mxu0 0.0
    %798 = vmatpush1.msra.mxu0 0.0
    %799 = vmatprep.subr.mxu0 0.0
    %800 = vmatpush1.msra.mxu0 0.0
    %801 = vmatprep.subr.mxu0 0.0
    %802 = vmatpush1.msra.mxu0 0.0
    %803 = vmatprep.subr.mxu0 0.0
    %804 = vmatpush1.msra.mxu0 0.0
    %805 = vmatprep.subr.mxu0 0.0
    %806 = vmatpush1.msra.mxu0 0.0
    %807 = vmatprep.subr.mxu0 0.0
    %808 = vmatpush1.msra.mxu0 0.0
    %809 = vmatprep.subr.mxu0 0.0
    %810 = vmatpush1.msra.mxu0 0.0
    %811 = vmatprep.mubr.f32.mxu0 0.0
    %812 = vmatmul.mubr.f32.gmra.mrb[0].mxu0 %v294
    %v813 = vpop.f32.mrb[0].mxu0
    %v814 = vadd.f32 %v745, %v813
    %v815 = vpop.f32.mrb[0].mxu0
    %816 = vdwg.mxu0
    %v817 = vmul.f32 %v814, %v33
    %v818 = vsel %vm367, %v817, 0.0
    %819 = vadd.xlane.f32.xlu0 %v818
    %v820 = vpop.xlane.xlu0 %819
    %vm821 = vcmp.eq.s32.totalorder %v280, 5
    %v822 = vsel %vm821, %v820, 0.0
    %v823 = vadd.f32 %v733, %v822
    %s824 = scalar_lea.vmem %s7, 192
    %v825 = vld [vmem:[%s824] sm:$0xff]
    %v826 = vld [vmem:[%s824 + $0x8] sm:$0xff]
    %v827 = vld [vmem:[%s824 + $0x10] sm:$0xff]
    %v828 = vld [vmem:[%s824 + $0x18] sm:$0xff]
    %s829 = scalar_lea.vmem %s8, 6
    %v830 = vld [vmem:[%s829] sm:$0x1]
    %v832 = vlaneseq
    %v833 = vshrl.u32 %v832, 7
    %v834 = vsub.s32 0, %v833
    %v835 = vrot.slane %v830, %v834
    %837 = vmatprep.subr.mxu0 0.0
    %838 = vmatpush1.msra.mxu0 %v825
    %839 = vmatprep.subr.mxu0 0.0
    %840 = vmatpush1.msra.mxu0 %v826
    %841 = vmatprep.subr.mxu0 0.0
    %842 = vmatpush1.msra.mxu0 %v827
    %843 = vmatprep.subr.mxu0 0.0
    %844 = vmatpush1.msra.mxu0 %v828
    %845 = vmatprep.subr.mxu0 0.0
    %846 = vmatpush1.msra.mxu0 0.0
    %847 = vmatprep.subr.mxu0 0.0
    %848 = vmatpush1.msra.mxu0 0.0
    %849 = vmatprep.subr.mxu0 0.0
    %850 = vmatpush1.msra.mxu0 0.0
    %851 = vmatprep.subr.mxu0 0.0
    %852 = vmatpush1.msra.mxu0 0.0
    %853 = vmatprep.subr.mxu0 0.0
    %854 = vmatpush1.msra.mxu0 0.0
    %855 = vmatprep.subr.mxu0 0.0
    %856 = vmatpush1.msra.mxu0 0.0
    %857 = vmatprep.subr.mxu0 0.0
    %858 = vmatpush1.msra.mxu0 0.0
    %859 = vmatprep.subr.mxu0 0.0
    %860 = vmatpush1.msra.mxu0 0.0
    %861 = vmatprep.subr.mxu0 0.0
    %862 = vmatpush1.msra.mxu0 0.0
    %863 = vmatprep.subr.mxu0 0.0
    %864 = vmatpush1.msra.mxu0 0.0
    %865 = vmatprep.subr.mxu0 0.0
    %866 = vmatpush1.msra.mxu0 0.0
    %867 = vmatprep.subr.mxu0 0.0
    %868 = vmatpush1.msra.mxu0 0.0
    %869 = vmatprep.subr.mxu0 0.0
    %870 = vmatpush1.msra.mxu0 0.0
    %871 = vmatprep.subr.mxu0 0.0
    %872 = vmatpush1.msra.mxu0 0.0
    %873 = vmatprep.subr.mxu0 0.0
    %874 = vmatpush1.msra.mxu0 0.0
    %875 = vmatprep.subr.mxu0 0.0
    %876 = vmatpush1.msra.mxu0 0.0
    %877 = vmatprep.subr.mxu0 0.0
    %878 = vmatpush1.msra.mxu0 0.0
    %879 = vmatprep.subr.mxu0 0.0
    %880 = vmatpush1.msra.mxu0 0.0
    %881 = vmatprep.subr.mxu0 0.0
    %882 = vmatpush1.msra.mxu0 0.0
    %883 = vmatprep.subr.mxu0 0.0
    %884 = vmatpush1.msra.mxu0 0.0
    %885 = vmatprep.subr.mxu0 0.0
    %886 = vmatpush1.msra.mxu0 0.0
    %887 = vmatprep.subr.mxu0 0.0
    %888 = vmatpush1.msra.mxu0 0.0
    %889 = vmatprep.subr.mxu0 0.0
    %890 = vmatpush1.msra.mxu0 0.0
    %891 = vmatprep.subr.mxu0 0.0
    %892 = vmatpush1.msra.mxu0 0.0
    %893 = vmatprep.subr.mxu0 0.0
    %894 = vmatpush1.msra.mxu0 0.0
    %895 = vmatprep.subr.mxu0 0.0
    %896 = vmatpush1.msra.mxu0 0.0
    %897 = vmatprep.subr.mxu0 0.0
    %898 = vmatpush1.msra.mxu0 0.0
    %899 = vmatprep.subr.mxu0 0.0
    %900 = vmatpush1.msra.mxu0 0.0
    %901 = vmatprep.mubr.f32.mxu0 0.0
    %902 = vmatmul.mubr.f32.gmra.mrb[0].mxu0 %v294
    %v903 = vpop.f32.mrb[0].mxu0
    %v904 = vadd.f32 %v835, %v903
    %v905 = vpop.f32.mrb[0].mxu0
    %906 = vdwg.mxu0
    %v907 = vmul.f32 %v904, %v33
    %v908 = vsel %vm367, %v907, 0.0
    %909 = vadd.xlane.f32.xlu0 %v908
    %v910 = vpop.xlane.xlu0 %909
    %vm911 = vcmp.eq.s32.totalorder %v280, 6
    %v912 = vsel %vm911, %v910, 0.0
    %v913 = vadd.f32 %v823, %v912
    %s914 = scalar_lea.vmem %s7, 224
    %v915 = vld [vmem:[%s914] sm:$0xff]
    %v916 = vld [vmem:[%s914 + $0x8] sm:$0xff]
    %v917 = vld [vmem:[%s914 + $0x10] sm:$0xff]
    %v918 = vld [vmem:[%s914 + $0x18] sm:$0xff]
    %s919 = scalar_lea.vmem %s8, 7
    %v920 = vld [vmem:[%s919] sm:$0x1]
    %v922 = vlaneseq
    %v923 = vshrl.u32 %v922, 7
    %v924 = vsub.s32 0, %v923
    %v925 = vrot.slane %v920, %v924
    %927 = vmatprep.subr.mxu0 0.0
    %928 = vmatpush1.msra.mxu0 %v915
    %929 = vmatprep.subr.mxu0 0.0
    %930 = vmatpush1.msra.mxu0 %v916
    %931 = vmatprep.subr.mxu0 0.0
    %932 = vmatpush1.msra.mxu0 %v917
    %933 = vmatprep.subr.mxu0 0.0
    %934 = vmatpush1.msra.mxu0 %v918
    %935 = vmatprep.subr.mxu0 0.0
    %936 = vmatpush1.msra.mxu0 0.0
    %937 = vmatprep.subr.mxu0 0.0
    %938 = vmatpush1.msra.mxu0 0.0
    %939 = vmatprep.subr.mxu0 0.0
    %940 = vmatpush1.msra.mxu0 0.0
    %941 = vmatprep.subr.mxu0 0.0
    %942 = vmatpush1.msra.mxu0 0.0
    %943 = vmatprep.subr.mxu0 0.0
    %944 = vmatpush1.msra.mxu0 0.0
    %945 = vmatprep.subr.mxu0 0.0
    %946 = vmatpush1.msra.mxu0 0.0
    %947 = vmatprep.subr.mxu0 0.0
    %948 = vmatpush1.msra.mxu0 0.0
    %949 = vmatprep.subr.mxu0 0.0
    %950 = vmatpush1.msra.mxu0 0.0
    %951 = vmatprep.subr.mxu0 0.0
    %952 = vmatpush1.msra.mxu0 0.0
    %953 = vmatprep.subr.mxu0 0.0
    %954 = vmatpush1.msra.mxu0 0.0
    %955 = vmatprep.subr.mxu0 0.0
    %956 = vmatpush1.msra.mxu0 0.0
    %957 = vmatprep.subr.mxu0 0.0
    %958 = vmatpush1.msra.mxu0 0.0
    %959 = vmatprep.subr.mxu0 0.0
    %960 = vmatpush1.msra.mxu0 0.0
    %961 = vmatprep.subr.mxu0 0.0
    %962 = vmatpush1.msra.mxu0 0.0
    %963 = vmatprep.subr.mxu0 0.0
    %964 = vmatpush1.msra.mxu0 0.0
    %965 = vmatprep.subr.mxu0 0.0
    %966 = vmatpush1.msra.mxu0 0.0
    %967 = vmatprep.subr.mxu0 0.0
    %968 = vmatpush1.msra.mxu0 0.0
    %969 = vmatprep.subr.mxu0 0.0
    %970 = vmatpush1.msra.mxu0 0.0
    %971 = vmatprep.subr.mxu0 0.0
    %972 = vmatpush1.msra.mxu0 0.0
    %973 = vmatprep.subr.mxu0 0.0
    %974 = vmatpush1.msra.mxu0 0.0
    %975 = vmatprep.subr.mxu0 0.0
    %976 = vmatpush1.msra.mxu0 0.0
    %977 = vmatprep.subr.mxu0 0.0
    %978 = vmatpush1.msra.mxu0 0.0
    %979 = vmatprep.subr.mxu0 0.0
    %980 = vmatpush1.msra.mxu0 0.0
    %981 = vmatprep.subr.mxu0 0.0
    %982 = vmatpush1.msra.mxu0 0.0
    %983 = vmatprep.subr.mxu0 0.0
    %984 = vmatpush1.msra.mxu0 0.0
    %985 = vmatprep.subr.mxu0 0.0
    %986 = vmatpush1.msra.mxu0 0.0
    %987 = vmatprep.subr.mxu0 0.0
    %988 = vmatpush1.msra.mxu0 0.0
    %989 = vmatprep.subr.mxu0 0.0
    %990 = vmatpush1.msra.mxu0 0.0
    %991 = vmatprep.mubr.f32.mxu0 0.0
    %992 = vmatmul.mubr.f32.gmra.mrb[0].mxu0 %v294
    %v993 = vpop.f32.mrb[0].mxu0
    %v994 = vadd.f32 %v925, %v993
    %v995 = vpop.f32.mrb[0].mxu0
    %996 = vdwg.mxu0
    %v997 = vmul.f32 %v994, %v33
    %v998 = vsel %vm367, %v997, 0.0
    %999 = vadd.xlane.f32.xlu0 %v998
    %v1000 = vpop.xlane.xlu0 %999
    %vm1001 = vcmp.eq.s32.totalorder %v280, 7
    %v1002 = vsel %vm1001, %v1000, 0.0
    %v1003 = vadd.f32 %v913, %v1002
    %s1004 = scalar_lea.vmem %s7, 256
    %v1005 = vld [vmem:[%s1004] sm:$0xff]
    %v1006 = vld [vmem:[%s1004 + $0x8] sm:$0xff]
    %v1007 = vld [vmem:[%s1004 + $0x10] sm:$0xff]
    %v1008 = vld [vmem:[%s1004 + $0x18] sm:$0xff]
    %s1009 = scalar_lea.vmem %s8, 8
    %v1010 = vld [vmem:[%s1009] sm:$0x1]
    %v1012 = vlaneseq
    %v1013 = vshrl.u32 %v1012, 7
    %v1014 = vsub.s32 0, %v1013
    %v1015 = vrot.slane %v1010, %v1014
    %1017 = vmatprep.subr.mxu0 0.0
    %1018 = vmatpush1.msra.mxu0 %v1005
    %1019 = vmatprep.subr.mxu0 0.0
    %1020 = vmatpush1.msra.mxu0 %v1006
    %1021 = vmatprep.subr.mxu0 0.0
    %1022 = vmatpush1.msra.mxu0 %v1007
    %1023 = vmatprep.subr.mxu0 0.0
    %1024 = vmatpush1.msra.mxu0 %v1008
    %1025 = vmatprep.subr.mxu0 0.0
    %1026 = vmatpush1.msra.mxu0 0.0
    %1027 = vmatprep.subr.mxu0 0.0
    %1028 = vmatpush1.msra.mxu0 0.0
    %1029 = vmatprep.subr.mxu0 0.0
    %1030 = vmatpush1.msra.mxu0 0.0
    %1031 = vmatprep.subr.mxu0 0.0
    %1032 = vmatpush1.msra.mxu0 0.0
    %1033 = vmatprep.subr.mxu0 0.0
    %1034 = vmatpush1.msra.mxu0 0.0
    %1035 = vmatprep.subr.mxu0 0.0
    %1036 = vmatpush1.msra.mxu0 0.0
    %1037 = vmatprep.subr.mxu0 0.0
    %1038 = vmatpush1.msra.mxu0 0.0
    %1039 = vmatprep.subr.mxu0 0.0
    %1040 = vmatpush1.msra.mxu0 0.0
    %1041 = vmatprep.subr.mxu0 0.0
    %1042 = vmatpush1.msra.mxu0 0.0
    %1043 = vmatprep.subr.mxu0 0.0
    %1044 = vmatpush1.msra.mxu0 0.0
    %1045 = vmatprep.subr.mxu0 0.0
    %1046 = vmatpush1.msra.mxu0 0.0
    %1047 = vmatprep.subr.mxu0 0.0
    %1048 = vmatpush1.msra.mxu0 0.0
    %1049 = vmatprep.subr.mxu0 0.0
    %1050 = vmatpush1.msra.mxu0 0.0
    %1051 = vmatprep.subr.mxu0 0.0
    %1052 = vmatpush1.msra.mxu0 0.0
    %1053 = vmatprep.subr.mxu0 0.0
    %1054 = vmatpush1.msra.mxu0 0.0
    %1055 = vmatprep.subr.mxu0 0.0
    %1056 = vmatpush1.msra.mxu0 0.0
    %1057 = vmatprep.subr.mxu0 0.0
    %1058 = vmatpush1.msra.mxu0 0.0
    %1059 = vmatprep.subr.mxu0 0.0
    %1060 = vmatpush1.msra.mxu0 0.0
    %1061 = vmatprep.subr.mxu0 0.0
    %1062 = vmatpush1.msra.mxu0 0.0
    %1063 = vmatprep.subr.mxu0 0.0
    %1064 = vmatpush1.msra.mxu0 0.0
    %1065 = vmatprep.subr.mxu0 0.0
    %1066 = vmatpush1.msra.mxu0 0.0
    %1067 = vmatprep.subr.mxu0 0.0
    %1068 = vmatpush1.msra.mxu0 0.0
    %1069 = vmatprep.subr.mxu0 0.0
    %1070 = vmatpush1.msra.mxu0 0.0
    %1071 = vmatprep.subr.mxu0 0.0
    %1072 = vmatpush1.msra.mxu0 0.0
    %1073 = vmatprep.subr.mxu0 0.0
    %1074 = vmatpush1.msra.mxu0 0.0
    %1075 = vmatprep.subr.mxu0 0.0
    %1076 = vmatpush1.msra.mxu0 0.0
    %1077 = vmatprep.subr.mxu0 0.0
    %1078 = vmatpush1.msra.mxu0 0.0
    %1079 = vmatprep.subr.mxu0 0.0
    %1080 = vmatpush1.msra.mxu0 0.0
    %1081 = vmatprep.mubr.f32.mxu0 0.0
    %1082 = vmatmul.mubr.f32.gmra.mrb[0].mxu0 %v294
    %v1083 = vpop.f32.mrb[0].mxu0
    %v1084 = vadd.f32 %v1015, %v1083
    %v1085 = vpop.f32.mrb[0].mxu0
    %1086 = vdwg.mxu0
    %v1087 = vmul.f32 %v1084, %v33
    %v1088 = vsel %vm367, %v1087, 0.0
    %1089 = vadd.xlane.f32.xlu0 %v1088
    %v1090 = vpop.xlane.xlu0 %1089
    %vm1091 = vcmp.eq.s32.totalorder %v280, 8
    %v1092 = vsel %vm1091, %v1090, 0.0
    %v1093 = vadd.f32 %v1003, %v1092
    %s1094 = scalar_lea.vmem %s7, 288
    %v1095 = vld [vmem:[%s1094] sm:$0xff]
    %v1096 = vld [vmem:[%s1094 + $0x8] sm:$0xff]
    %v1097 = vld [vmem:[%s1094 + $0x10] sm:$0xff]
    %v1098 = vld [vmem:[%s1094 + $0x18] sm:$0xff]
    %s1099 = scalar_lea.vmem %s8, 9
    %v1100 = vld [vmem:[%s1099] sm:$0x1]
    %v1102 = vlaneseq
    %v1103 = vshrl.u32 %v1102, 7
    %v1104 = vsub.s32 0, %v1103
    %v1105 = vrot.slane %v1100, %v1104
    %1107 = vmatprep.subr.mxu0 0.0
    %1108 = vmatpush1.msra.mxu0 %v1095
    %1109 = vmatprep.subr.mxu0 0.0
    %1110 = vmatpush1.msra.mxu0 %v1096
    %1111 = vmatprep.subr.mxu0 0.0
    %1112 = vmatpush1.msra.mxu0 %v1097
    %1113 = vmatprep.subr.mxu0 0.0
    %1114 = vmatpush1.msra.mxu0 %v1098
    %1115 = vmatprep.subr.mxu0 0.0
    %1116 = vmatpush1.msra.mxu0 0.0
    %1117 = vmatprep.subr.mxu0 0.0
    %1118 = vmatpush1.msra.mxu0 0.0
    %1119 = vmatprep.subr.mxu0 0.0
    %1120 = vmatpush1.msra.mxu0 0.0
    %1121 = vmatprep.subr.mxu0 0.0
    %1122 = vmatpush1.msra.mxu0 0.0
    %1123 = vmatprep.subr.mxu0 0.0
    %1124 = vmatpush1.msra.mxu0 0.0
    %1125 = vmatprep.subr.mxu0 0.0
    %1126 = vmatpush1.msra.mxu0 0.0
    %1127 = vmatprep.subr.mxu0 0.0
    %1128 = vmatpush1.msra.mxu0 0.0
    %1129 = vmatprep.subr.mxu0 0.0
    %1130 = vmatpush1.msra.mxu0 0.0
    %1131 = vmatprep.subr.mxu0 0.0
    %1132 = vmatpush1.msra.mxu0 0.0
    %1133 = vmatprep.subr.mxu0 0.0
    %1134 = vmatpush1.msra.mxu0 0.0
    %1135 = vmatprep.subr.mxu0 0.0
    %1136 = vmatpush1.msra.mxu0 0.0
    %1137 = vmatprep.subr.mxu0 0.0
    %1138 = vmatpush1.msra.mxu0 0.0
    %1139 = vmatprep.subr.mxu0 0.0
    %1140 = vmatpush1.msra.mxu0 0.0
    %1141 = vmatprep.subr.mxu0 0.0
    %1142 = vmatpush1.msra.mxu0 0.0
    %1143 = vmatprep.subr.mxu0 0.0
    %1144 = vmatpush1.msra.mxu0 0.0
    %1145 = vmatprep.subr.mxu0 0.0
    %1146 = vmatpush1.msra.mxu0 0.0
    %1147 = vmatprep.subr.mxu0 0.0
    %1148 = vmatpush1.msra.mxu0 0.0
    %1149 = vmatprep.subr.mxu0 0.0
    %1150 = vmatpush1.msra.mxu0 0.0
    %1151 = vmatprep.subr.mxu0 0.0
    %1152 = vmatpush1.msra.mxu0 0.0
    %1153 = vmatprep.subr.mxu0 0.0
    %1154 = vmatpush1.msra.mxu0 0.0
    %1155 = vmatprep.subr.mxu0 0.0
    %1156 = vmatpush1.msra.mxu0 0.0
    %1157 = vmatprep.subr.mxu0 0.0
    %1158 = vmatpush1.msra.mxu0 0.0
    %1159 = vmatprep.subr.mxu0 0.0
    %1160 = vmatpush1.msra.mxu0 0.0
    %1161 = vmatprep.subr.mxu0 0.0
    %1162 = vmatpush1.msra.mxu0 0.0
    %1163 = vmatprep.subr.mxu0 0.0
    %1164 = vmatpush1.msra.mxu0 0.0
    %1165 = vmatprep.subr.mxu0 0.0
    %1166 = vmatpush1.msra.mxu0 0.0
    %1167 = vmatprep.subr.mxu0 0.0
    %1168 = vmatpush1.msra.mxu0 0.0
    %1169 = vmatprep.subr.mxu0 0.0
    %1170 = vmatpush1.msra.mxu0 0.0
    %1171 = vmatprep.mubr.f32.mxu0 0.0
    %1172 = vmatmul.mubr.f32.gmra.mrb[0].mxu0 %v294
    %v1173 = vpop.f32.mrb[0].mxu0
    %v1174 = vadd.f32 %v1105, %v1173
    %v1175 = vpop.f32.mrb[0].mxu0
    %1176 = vdwg.mxu0
    %v1177 = vmul.f32 %v1174, %v33
    %v1178 = vsel %vm367, %v1177, 0.0
    %1179 = vadd.xlane.f32.xlu0 %v1178
    %v1180 = vpop.xlane.xlu0 %1179
    %vm1181 = vcmp.eq.s32.totalorder %v280, 9
    %v1182 = vsel %vm1181, %v1180, 0.0
    %v1183 = vadd.f32 %v1093, %v1182
    %s1184 = scalar_lea.vmem %s7, 320
    %v1185 = vld [vmem:[%s1184] sm:$0xff]
    %v1186 = vld [vmem:[%s1184 + $0x8] sm:$0xff]
    %v1187 = vld [vmem:[%s1184 + $0x10] sm:$0xff]
    %v1188 = vld [vmem:[%s1184 + $0x18] sm:$0xff]
    %s1189 = scalar_lea.vmem %s8, 10
    %v1190 = vld [vmem:[%s1189] sm:$0x1]
    %v1192 = vlaneseq
    %v1193 = vshrl.u32 %v1192, 7
    %v1194 = vsub.s32 0, %v1193
    %v1195 = vrot.slane %v1190, %v1194
    %1197 = vmatprep.subr.mxu0 0.0
    %1198 = vmatpush1.msra.mxu0 %v1185
    %1199 = vmatprep.subr.mxu0 0.0
    %1200 = vmatpush1.msra.mxu0 %v1186
    %1201 = vmatprep.subr.mxu0 0.0
    %1202 = vmatpush1.msra.mxu0 %v1187
    %1203 = vmatprep.subr.mxu0 0.0
    %1204 = vmatpush1.msra.mxu0 %v1188
    %1205 = vmatprep.subr.mxu0 0.0
    %1206 = vmatpush1.msra.mxu0 0.0
    %1207 = vmatprep.subr.mxu0 0.0
    %1208 = vmatpush1.msra.mxu0 0.0
    %1209 = vmatprep.subr.mxu0 0.0
    %1210 = vmatpush1.msra.mxu0 0.0
    %1211 = vmatprep.subr.mxu0 0.0
    %1212 = vmatpush1.msra.mxu0 0.0
    %1213 = vmatprep.subr.mxu0 0.0
    %1214 = vmatpush1.msra.mxu0 0.0
    %1215 = vmatprep.subr.mxu0 0.0
    %1216 = vmatpush1.msra.mxu0 0.0
    %1217 = vmatprep.subr.mxu0 0.0
    %1218 = vmatpush1.msra.mxu0 0.0
    %1219 = vmatprep.subr.mxu0 0.0
    %1220 = vmatpush1.msra.mxu0 0.0
    %1221 = vmatprep.subr.mxu0 0.0
    %1222 = vmatpush1.msra.mxu0 0.0
    %1223 = vmatprep.subr.mxu0 0.0
    %1224 = vmatpush1.msra.mxu0 0.0
    %1225 = vmatprep.subr.mxu0 0.0
    %1226 = vmatpush1.msra.mxu0 0.0
    %1227 = vmatprep.subr.mxu0 0.0
    %1228 = vmatpush1.msra.mxu0 0.0
    %1229 = vmatprep.subr.mxu0 0.0
    %1230 = vmatpush1.msra.mxu0 0.0
    %1231 = vmatprep.subr.mxu0 0.0
    %1232 = vmatpush1.msra.mxu0 0.0
    %1233 = vmatprep.subr.mxu0 0.0
    %1234 = vmatpush1.msra.mxu0 0.0
    %1235 = vmatprep.subr.mxu0 0.0
    %1236 = vmatpush1.msra.mxu0 0.0
    %1237 = vmatprep.subr.mxu0 0.0
    %1238 = vmatpush1.msra.mxu0 0.0
    %1239 = vmatprep.subr.mxu0 0.0
    %1240 = vmatpush1.msra.mxu0 0.0
    %1241 = vmatprep.subr.mxu0 0.0
    %1242 = vmatpush1.msra.mxu0 0.0
    %1243 = vmatprep.subr.mxu0 0.0
    %1244 = vmatpush1.msra.mxu0 0.0
    %1245 = vmatprep.subr.mxu0 0.0
    %1246 = vmatpush1.msra.mxu0 0.0
    %1247 = vmatprep.subr.mxu0 0.0
    %1248 = vmatpush1.msra.mxu0 0.0
    %1249 = vmatprep.subr.mxu0 0.0
    %1250 = vmatpush1.msra.mxu0 0.0
    %1251 = vmatprep.subr.mxu0 0.0
    %1252 = vmatpush1.msra.mxu0 0.0
    %1253 = vmatprep.subr.mxu0 0.0
    %1254 = vmatpush1.msra.mxu0 0.0
    %1255 = vmatprep.subr.mxu0 0.0
    %1256 = vmatpush1.msra.mxu0 0.0
    %1257 = vmatprep.subr.mxu0 0.0
    %1258 = vmatpush1.msra.mxu0 0.0
    %1259 = vmatprep.subr.mxu0 0.0
    %1260 = vmatpush1.msra.mxu0 0.0
    %1261 = vmatprep.mubr.f32.mxu0 0.0
    %1262 = vmatmul.mubr.f32.gmra.mrb[0].mxu0 %v294
    %v1263 = vpop.f32.mrb[0].mxu0
    %v1264 = vadd.f32 %v1195, %v1263
    %v1265 = vpop.f32.mrb[0].mxu0
    %1266 = vdwg.mxu0
    %v1267 = vmul.f32 %v1264, %v33
    %v1268 = vsel %vm367, %v1267, 0.0
    %1269 = vadd.xlane.f32.xlu0 %v1268
    %v1270 = vpop.xlane.xlu0 %1269
    %vm1271 = vcmp.eq.s32.totalorder %v280, 10
    %v1272 = vsel %vm1271, %v1270, 0.0
    %v1273 = vadd.f32 %v1183, %v1272
    %s1274 = scalar_lea.vmem %s7, 352
    %v1275 = vld [vmem:[%s1274] sm:$0xff]
    %v1276 = vld [vmem:[%s1274 + $0x8] sm:$0xff]
    %v1277 = vld [vmem:[%s1274 + $0x10] sm:$0xff]
    %v1278 = vld [vmem:[%s1274 + $0x18] sm:$0xff]
    %s1279 = scalar_lea.vmem %s8, 11
    %v1280 = vld [vmem:[%s1279] sm:$0x1]
    %v1282 = vlaneseq
    %v1283 = vshrl.u32 %v1282, 7
    %v1284 = vsub.s32 0, %v1283
    %v1285 = vrot.slane %v1280, %v1284
    %1287 = vmatprep.subr.mxu0 0.0
    %1288 = vmatpush1.msra.mxu0 %v1275
    %1289 = vmatprep.subr.mxu0 0.0
    %1290 = vmatpush1.msra.mxu0 %v1276
    %1291 = vmatprep.subr.mxu0 0.0
    %1292 = vmatpush1.msra.mxu0 %v1277
    %1293 = vmatprep.subr.mxu0 0.0
    %1294 = vmatpush1.msra.mxu0 %v1278
    %1295 = vmatprep.subr.mxu0 0.0
    %1296 = vmatpush1.msra.mxu0 0.0
    %1297 = vmatprep.subr.mxu0 0.0
    %1298 = vmatpush1.msra.mxu0 0.0
    %1299 = vmatprep.subr.mxu0 0.0
    %1300 = vmatpush1.msra.mxu0 0.0
    %1301 = vmatprep.subr.mxu0 0.0
    %1302 = vmatpush1.msra.mxu0 0.0
    %1303 = vmatprep.subr.mxu0 0.0
    %1304 = vmatpush1.msra.mxu0 0.0
    %1305 = vmatprep.subr.mxu0 0.0
    %1306 = vmatpush1.msra.mxu0 0.0
    %1307 = vmatprep.subr.mxu0 0.0
    %1308 = vmatpush1.msra.mxu0 0.0
    %1309 = vmatprep.subr.mxu0 0.0
    %1310 = vmatpush1.msra.mxu0 0.0
    %1311 = vmatprep.subr.mxu0 0.0
    %1312 = vmatpush1.msra.mxu0 0.0
    %1313 = vmatprep.subr.mxu0 0.0
    %1314 = vmatpush1.msra.mxu0 0.0
    %1315 = vmatprep.subr.mxu0 0.0
    %1316 = vmatpush1.msra.mxu0 0.0
    %1317 = vmatprep.subr.mxu0 0.0
    %1318 = vmatpush1.msra.mxu0 0.0
    %1319 = vmatprep.subr.mxu0 0.0
    %1320 = vmatpush1.msra.mxu0 0.0
    %1321 = vmatprep.subr.mxu0 0.0
    %1322 = vmatpush1.msra.mxu0 0.0
    %1323 = vmatprep.subr.mxu0 0.0
    %1324 = vmatpush1.msra.mxu0 0.0
    %1325 = vmatprep.subr.mxu0 0.0
    %1326 = vmatpush1.msra.mxu0 0.0
    %1327 = vmatprep.subr.mxu0 0.0
    %1328 = vmatpush1.msra.mxu0 0.0
    %1329 = vmatprep.subr.mxu0 0.0
    %1330 = vmatpush1.msra.mxu0 0.0
    %1331 = vmatprep.subr.mxu0 0.0
    %1332 = vmatpush1.msra.mxu0 0.0
    %1333 = vmatprep.subr.mxu0 0.0
    %1334 = vmatpush1.msra.mxu0 0.0
    %1335 = vmatprep.subr.mxu0 0.0
    %1336 = vmatpush1.msra.mxu0 0.0
    %1337 = vmatprep.subr.mxu0 0.0
    %1338 = vmatpush1.msra.mxu0 0.0
    %1339 = vmatprep.subr.mxu0 0.0
    %1340 = vmatpush1.msra.mxu0 0.0
    %1341 = vmatprep.subr.mxu0 0.0
    %1342 = vmatpush1.msra.mxu0 0.0
    %1343 = vmatprep.subr.mxu0 0.0
    %1344 = vmatpush1.msra.mxu0 0.0
    %1345 = vmatprep.subr.mxu0 0.0
    %1346 = vmatpush1.msra.mxu0 0.0
    %1347 = vmatprep.subr.mxu0 0.0
    %1348 = vmatpush1.msra.mxu0 0.0
    %1349 = vmatprep.subr.mxu0 0.0
    %1350 = vmatpush1.msra.mxu0 0.0
    %1351 = vmatprep.mubr.f32.mxu0 0.0
    %1352 = vmatmul.mubr.f32.gmra.mrb[0].mxu0 %v294
    %v1353 = vpop.f32.mrb[0].mxu0
    %v1354 = vadd.f32 %v1285, %v1353
    %v1355 = vpop.f32.mrb[0].mxu0
    %1356 = vdwg.mxu0
    %v1357 = vmul.f32 %v1354, %v33
    %v1358 = vsel %vm367, %v1357, 0.0
    %1359 = vadd.xlane.f32.xlu0 %v1358
    %v1360 = vpop.xlane.xlu0 %1359
    %vm1361 = vcmp.eq.s32.totalorder %v280, 11
    %v1362 = vsel %vm1361, %v1360, 0.0
    %v1363 = vadd.f32 %v1273, %v1362
    %s1364 = scalar_lea.vmem %s7, 384
    %v1365 = vld [vmem:[%s1364] sm:$0xff]
    %v1366 = vld [vmem:[%s1364 + $0x8] sm:$0xff]
    %v1367 = vld [vmem:[%s1364 + $0x10] sm:$0xff]
    %v1368 = vld [vmem:[%s1364 + $0x18] sm:$0xff]
    %s1369 = scalar_lea.vmem %s8, 12
    %v1370 = vld [vmem:[%s1369] sm:$0x1]
    %v1372 = vlaneseq
    %v1373 = vshrl.u32 %v1372, 7
    %v1374 = vsub.s32 0, %v1373
    %v1375 = vrot.slane %v1370, %v1374
    %1377 = vmatprep.subr.mxu0 0.0
    %1378 = vmatpush1.msra.mxu0 %v1365
    %1379 = vmatprep.subr.mxu0 0.0
    %1380 = vmatpush1.msra.mxu0 %v1366
    %1381 = vmatprep.subr.mxu0 0.0
    %1382 = vmatpush1.msra.mxu0 %v1367
    %1383 = vmatprep.subr.mxu0 0.0
    %1384 = vmatpush1.msra.mxu0 %v1368
    %1385 = vmatprep.subr.mxu0 0.0
    %1386 = vmatpush1.msra.mxu0 0.0
    %1387 = vmatprep.subr.mxu0 0.0
    %1388 = vmatpush1.msra.mxu0 0.0
    %1389 = vmatprep.subr.mxu0 0.0
    %1390 = vmatpush1.msra.mxu0 0.0
    %1391 = vmatprep.subr.mxu0 0.0
    %1392 = vmatpush1.msra.mxu0 0.0
    %1393 = vmatprep.subr.mxu0 0.0
    %1394 = vmatpush1.msra.mxu0 0.0
    %1395 = vmatprep.subr.mxu0 0.0
    %1396 = vmatpush1.msra.mxu0 0.0
    %1397 = vmatprep.subr.mxu0 0.0
    %1398 = vmatpush1.msra.mxu0 0.0
    %1399 = vmatprep.subr.mxu0 0.0
    %1400 = vmatpush1.msra.mxu0 0.0
    %1401 = vmatprep.subr.mxu0 0.0
    %1402 = vmatpush1.msra.mxu0 0.0
    %1403 = vmatprep.subr.mxu0 0.0
    %1404 = vmatpush1.msra.mxu0 0.0
    %1405 = vmatprep.subr.mxu0 0.0
    %1406 = vmatpush1.msra.mxu0 0.0
    %1407 = vmatprep.subr.mxu0 0.0
    %1408 = vmatpush1.msra.mxu0 0.0
    %1409 = vmatprep.subr.mxu0 0.0
    %1410 = vmatpush1.msra.mxu0 0.0
    %1411 = vmatprep.subr.mxu0 0.0
    %1412 = vmatpush1.msra.mxu0 0.0
    %1413 = vmatprep.subr.mxu0 0.0
    %1414 = vmatpush1.msra.mxu0 0.0
    %1415 = vmatprep.subr.mxu0 0.0
    %1416 = vmatpush1.msra.mxu0 0.0
    %1417 = vmatprep.subr.mxu0 0.0
    %1418 = vmatpush1.msra.mxu0 0.0
    %1419 = vmatprep.subr.mxu0 0.0
    %1420 = vmatpush1.msra.mxu0 0.0
    %1421 = vmatprep.subr.mxu0 0.0
    %1422 = vmatpush1.msra.mxu0 0.0
    %1423 = vmatprep.subr.mxu0 0.0
    %1424 = vmatpush1.msra.mxu0 0.0
    %1425 = vmatprep.subr.mxu0 0.0
    %1426 = vmatpush1.msra.mxu0 0.0
    %1427 = vmatprep.subr.mxu0 0.0
    %1428 = vmatpush1.msra.mxu0 0.0
    %1429 = vmatprep.subr.mxu0 0.0
    %1430 = vmatpush1.msra.mxu0 0.0
    %1431 = vmatprep.subr.mxu0 0.0
    %1432 = vmatpush1.msra.mxu0 0.0
    %1433 = vmatprep.subr.mxu0 0.0
    %1434 = vmatpush1.msra.mxu0 0.0
    %1435 = vmatprep.subr.mxu0 0.0
    %1436 = vmatpush1.msra.mxu0 0.0
    %1437 = vmatprep.subr.mxu0 0.0
    %1438 = vmatpush1.msra.mxu0 0.0
    %1439 = vmatprep.subr.mxu0 0.0
    %1440 = vmatpush1.msra.mxu0 0.0
    %1441 = vmatprep.mubr.f32.mxu0 0.0
    %1442 = vmatmul.mubr.f32.gmra.mrb[0].mxu0 %v294
    %v1443 = vpop.f32.mrb[0].mxu0
    %v1444 = vadd.f32 %v1375, %v1443
    %v1445 = vpop.f32.mrb[0].mxu0
    %1446 = vdwg.mxu0
    %v1447 = vmul.f32 %v1444, %v33
    %v1448 = vsel %vm367, %v1447, 0.0
    %1449 = vadd.xlane.f32.xlu0 %v1448
    %v1450 = vpop.xlane.xlu0 %1449
    %vm1451 = vcmp.eq.s32.totalorder %v280, 12
    %v1452 = vsel %vm1451, %v1450, 0.0
    %v1453 = vadd.f32 %v1363, %v1452
    %s1454 = scalar_lea.vmem %s7, 416
    %v1455 = vld [vmem:[%s1454] sm:$0xff]
    %v1456 = vld [vmem:[%s1454 + $0x8] sm:$0xff]
    %v1457 = vld [vmem:[%s1454 + $0x10] sm:$0xff]
    %v1458 = vld [vmem:[%s1454 + $0x18] sm:$0xff]
    %s1459 = scalar_lea.vmem %s8, 13
    %v1460 = vld [vmem:[%s1459] sm:$0x1]
    %v1462 = vlaneseq
    %v1463 = vshrl.u32 %v1462, 7
    %v1464 = vsub.s32 0, %v1463
    %v1465 = vrot.slane %v1460, %v1464
    %1467 = vmatprep.subr.mxu0 0.0
    %1468 = vmatpush1.msra.mxu0 %v1455
    %1469 = vmatprep.subr.mxu0 0.0
    %1470 = vmatpush1.msra.mxu0 %v1456
    %1471 = vmatprep.subr.mxu0 0.0
    %1472 = vmatpush1.msra.mxu0 %v1457
    %1473 = vmatprep.subr.mxu0 0.0
    %1474 = vmatpush1.msra.mxu0 %v1458
    %1475 = vmatprep.subr.mxu0 0.0
    %1476 = vmatpush1.msra.mxu0 0.0
    %1477 = vmatprep.subr.mxu0 0.0
    %1478 = vmatpush1.msra.mxu0 0.0
    %1479 = vmatprep.subr.mxu0 0.0
    %1480 = vmatpush1.msra.mxu0 0.0
    %1481 = vmatprep.subr.mxu0 0.0
    %1482 = vmatpush1.msra.mxu0 0.0
    %1483 = vmatprep.subr.mxu0 0.0
    %1484 = vmatpush1.msra.mxu0 0.0
    %1485 = vmatprep.subr.mxu0 0.0
    %1486 = vmatpush1.msra.mxu0 0.0
    %1487 = vmatprep.subr.mxu0 0.0
    %1488 = vmatpush1.msra.mxu0 0.0
    %1489 = vmatprep.subr.mxu0 0.0
    %1490 = vmatpush1.msra.mxu0 0.0
    %1491 = vmatprep.subr.mxu0 0.0
    %1492 = vmatpush1.msra.mxu0 0.0
    %1493 = vmatprep.subr.mxu0 0.0
    %1494 = vmatpush1.msra.mxu0 0.0
    %1495 = vmatprep.subr.mxu0 0.0
    %1496 = vmatpush1.msra.mxu0 0.0
    %1497 = vmatprep.subr.mxu0 0.0
    %1498 = vmatpush1.msra.mxu0 0.0
    %1499 = vmatprep.subr.mxu0 0.0
    %1500 = vmatpush1.msra.mxu0 0.0
    %1501 = vmatprep.subr.mxu0 0.0
    %1502 = vmatpush1.msra.mxu0 0.0
    %1503 = vmatprep.subr.mxu0 0.0
    %1504 = vmatpush1.msra.mxu0 0.0
    %1505 = vmatprep.subr.mxu0 0.0
    %1506 = vmatpush1.msra.mxu0 0.0
    %1507 = vmatprep.subr.mxu0 0.0
    %1508 = vmatpush1.msra.mxu0 0.0
    %1509 = vmatprep.subr.mxu0 0.0
    %1510 = vmatpush1.msra.mxu0 0.0
    %1511 = vmatprep.subr.mxu0 0.0
    %1512 = vmatpush1.msra.mxu0 0.0
    %1513 = vmatprep.subr.mxu0 0.0
    %1514 = vmatpush1.msra.mxu0 0.0
    %1515 = vmatprep.subr.mxu0 0.0
    %1516 = vmatpush1.msra.mxu0 0.0
    %1517 = vmatprep.subr.mxu0 0.0
    %1518 = vmatpush1.msra.mxu0 0.0
    %1519 = vmatprep.subr.mxu0 0.0
    %1520 = vmatpush1.msra.mxu0 0.0
    %1521 = vmatprep.subr.mxu0 0.0
    %1522 = vmatpush1.msra.mxu0 0.0
    %1523 = vmatprep.subr.mxu0 0.0
    %1524 = vmatpush1.msra.mxu0 0.0
    %1525 = vmatprep.subr.mxu0 0.0
    %1526 = vmatpush1.msra.mxu0 0.0
    %1527 = vmatprep.subr.mxu0 0.0
    %1528 = vmatpush1.msra.mxu0 0.0
    %1529 = vmatprep.subr.mxu0 0.0
    %1530 = vmatpush1.msra.mxu0 0.0
    %1531 = vmatprep.mubr.f32.mxu0 0.0
    %1532 = vmatmul.mubr.f32.gmra.mrb[0].mxu0 %v294
    %v1533 = vpop.f32.mrb[0].mxu0
    %v1534 = vadd.f32 %v1465, %v1533
    %v1535 = vpop.f32.mrb[0].mxu0
    %1536 = vdwg.mxu0
    %v1537 = vmul.f32 %v1534, %v33
    %v1538 = vsel %vm367, %v1537, 0.0
    %1539 = vadd.xlane.f32.xlu0 %v1538
    %v1540 = vpop.xlane.xlu0 %1539
    %vm1541 = vcmp.eq.s32.totalorder %v280, 13
    %v1542 = vsel %vm1541, %v1540, 0.0
    %v1543 = vadd.f32 %v1453, %v1542
    %s1544 = scalar_lea.vmem %s7, 448
    %v1545 = vld [vmem:[%s1544] sm:$0xff]
    %v1546 = vld [vmem:[%s1544 + $0x8] sm:$0xff]
    %v1547 = vld [vmem:[%s1544 + $0x10] sm:$0xff]
    %v1548 = vld [vmem:[%s1544 + $0x18] sm:$0xff]
    %s1549 = scalar_lea.vmem %s8, 14
    %v1550 = vld [vmem:[%s1549] sm:$0x1]
    %v1552 = vlaneseq
    %v1553 = vshrl.u32 %v1552, 7
    %v1554 = vsub.s32 0, %v1553
    %v1555 = vrot.slane %v1550, %v1554
    %1557 = vmatprep.subr.mxu0 0.0
    %1558 = vmatpush1.msra.mxu0 %v1545
    %1559 = vmatprep.subr.mxu0 0.0
    %1560 = vmatpush1.msra.mxu0 %v1546
    %1561 = vmatprep.subr.mxu0 0.0
    %1562 = vmatpush1.msra.mxu0 %v1547
    %1563 = vmatprep.subr.mxu0 0.0
    %1564 = vmatpush1.msra.mxu0 %v1548
    %1565 = vmatprep.subr.mxu0 0.0
    %1566 = vmatpush1.msra.mxu0 0.0
    %1567 = vmatprep.subr.mxu0 0.0
    %1568 = vmatpush1.msra.mxu0 0.0
    %1569 = vmatprep.subr.mxu0 0.0
    %1570 = vmatpush1.msra.mxu0 0.0
    %1571 = vmatprep.subr.mxu0 0.0
    %1572 = vmatpush1.msra.mxu0 0.0
    %1573 = vmatprep.subr.mxu0 0.0
    %1574 = vmatpush1.msra.mxu0 0.0
    %1575 = vmatprep.subr.mxu0 0.0
    %1576 = vmatpush1.msra.mxu0 0.0
    %1577 = vmatprep.subr.mxu0 0.0
    %1578 = vmatpush1.msra.mxu0 0.0
    %1579 = vmatprep.subr.mxu0 0.0
    %1580 = vmatpush1.msra.mxu0 0.0
    %1581 = vmatprep.subr.mxu0 0.0
    %1582 = vmatpush1.msra.mxu0 0.0
    %1583 = vmatprep.subr.mxu0 0.0
    %1584 = vmatpush1.msra.mxu0 0.0
    %1585 = vmatprep.subr.mxu0 0.0
    %1586 = vmatpush1.msra.mxu0 0.0
    %1587 = vmatprep.subr.mxu0 0.0
    %1588 = vmatpush1.msra.mxu0 0.0
    %1589 = vmatprep.subr.mxu0 0.0
    %1590 = vmatpush1.msra.mxu0 0.0
    %1591 = vmatprep.subr.mxu0 0.0
    %1592 = vmatpush1.msra.mxu0 0.0
    %1593 = vmatprep.subr.mxu0 0.0
    %1594 = vmatpush1.msra.mxu0 0.0
    %1595 = vmatprep.subr.mxu0 0.0
    %1596 = vmatpush1.msra.mxu0 0.0
    %1597 = vmatprep.subr.mxu0 0.0
    %1598 = vmatpush1.msra.mxu0 0.0
    %1599 = vmatprep.subr.mxu0 0.0
    %1600 = vmatpush1.msra.mxu0 0.0
    %1601 = vmatprep.subr.mxu0 0.0
    %1602 = vmatpush1.msra.mxu0 0.0
    %1603 = vmatprep.subr.mxu0 0.0
    %1604 = vmatpush1.msra.mxu0 0.0
    %1605 = vmatprep.subr.mxu0 0.0
    %1606 = vmatpush1.msra.mxu0 0.0
    %1607 = vmatprep.subr.mxu0 0.0
    %1608 = vmatpush1.msra.mxu0 0.0
    %1609 = vmatprep.subr.mxu0 0.0
    %1610 = vmatpush1.msra.mxu0 0.0
    %1611 = vmatprep.subr.mxu0 0.0
    %1612 = vmatpush1.msra.mxu0 0.0
    %1613 = vmatprep.subr.mxu0 0.0
    %1614 = vmatpush1.msra.mxu0 0.0
    %1615 = vmatprep.subr.mxu0 0.0
    %1616 = vmatpush1.msra.mxu0 0.0
    %1617 = vmatprep.subr.mxu0 0.0
    %1618 = vmatpush1.msra.mxu0 0.0
    %1619 = vmatprep.subr.mxu0 0.0
    %1620 = vmatpush1.msra.mxu0 0.0
    %1621 = vmatprep.mubr.f32.mxu0 0.0
    %1622 = vmatmul.mubr.f32.gmra.mrb[0].mxu0 %v294
    %v1623 = vpop.f32.mrb[0].mxu0
    %v1624 = vadd.f32 %v1555, %v1623
    %v1625 = vpop.f32.mrb[0].mxu0
    %1626 = vdwg.mxu0
    %v1627 = vmul.f32 %v1624, %v33
    %v1628 = vsel %vm367, %v1627, 0.0
    %1629 = vadd.xlane.f32.xlu0 %v1628
    %v1630 = vpop.xlane.xlu0 %1629
    %vm1631 = vcmp.eq.s32.totalorder %v280, 14
    %v1632 = vsel %vm1631, %v1630, 0.0
    %v1633 = vadd.f32 %v1543, %v1632
    %s1634 = scalar_lea.vmem %s7, 480
    %v1635 = vld [vmem:[%s1634] sm:$0xff]
    %v1636 = vld [vmem:[%s1634 + $0x8] sm:$0xff]
    %v1637 = vld [vmem:[%s1634 + $0x10] sm:$0xff]
    %v1638 = vld [vmem:[%s1634 + $0x18] sm:$0xff]
    %s1639 = scalar_lea.vmem %s8, 15
    %v1640 = vld [vmem:[%s1639] sm:$0x1]
    %v1642 = vlaneseq
    %v1643 = vshrl.u32 %v1642, 7
    %v1644 = vsub.s32 0, %v1643
    %v1645 = vrot.slane %v1640, %v1644
    %1647 = vmatprep.subr.mxu0 0.0
    %1648 = vmatpush1.msra.mxu0 %v1635
    %1649 = vmatprep.subr.mxu0 0.0
    %1650 = vmatpush1.msra.mxu0 %v1636
    %1651 = vmatprep.subr.mxu0 0.0
    %1652 = vmatpush1.msra.mxu0 %v1637
    %1653 = vmatprep.subr.mxu0 0.0
    %1654 = vmatpush1.msra.mxu0 %v1638
    %1655 = vmatprep.subr.mxu0 0.0
    %1656 = vmatpush1.msra.mxu0 0.0
    %1657 = vmatprep.subr.mxu0 0.0
    %1658 = vmatpush1.msra.mxu0 0.0
    %1659 = vmatprep.subr.mxu0 0.0
    %1660 = vmatpush1.msra.mxu0 0.0
    %1661 = vmatprep.subr.mxu0 0.0
    %1662 = vmatpush1.msra.mxu0 0.0
    %1663 = vmatprep.subr.mxu0 0.0
    %1664 = vmatpush1.msra.mxu0 0.0
    %1665 = vmatprep.subr.mxu0 0.0
    %1666 = vmatpush1.msra.mxu0 0.0
    %1667 = vmatprep.subr.mxu0 0.0
    %1668 = vmatpush1.msra.mxu0 0.0
    %1669 = vmatprep.subr.mxu0 0.0
    %1670 = vmatpush1.msra.mxu0 0.0
    %1671 = vmatprep.subr.mxu0 0.0
    %1672 = vmatpush1.msra.mxu0 0.0
    %1673 = vmatprep.subr.mxu0 0.0
    %1674 = vmatpush1.msra.mxu0 0.0
    %1675 = vmatprep.subr.mxu0 0.0
    %1676 = vmatpush1.msra.mxu0 0.0
    %1677 = vmatprep.subr.mxu0 0.0
    %1678 = vmatpush1.msra.mxu0 0.0
    %1679 = vmatprep.subr.mxu0 0.0
    %1680 = vmatpush1.msra.mxu0 0.0
    %1681 = vmatprep.subr.mxu0 0.0
    %1682 = vmatpush1.msra.mxu0 0.0
    %1683 = vmatprep.subr.mxu0 0.0
    %1684 = vmatpush1.msra.mxu0 0.0
    %1685 = vmatprep.subr.mxu0 0.0
    %1686 = vmatpush1.msra.mxu0 0.0
    %1687 = vmatprep.subr.mxu0 0.0
    %1688 = vmatpush1.msra.mxu0 0.0
    %1689 = vmatprep.subr.mxu0 0.0
    %1690 = vmatpush1.msra.mxu0 0.0
    %1691 = vmatprep.subr.mxu0 0.0
    %1692 = vmatpush1.msra.mxu0 0.0
    %1693 = vmatprep.subr.mxu0 0.0
    %1694 = vmatpush1.msra.mxu0 0.0
    %1695 = vmatprep.subr.mxu0 0.0
    %1696 = vmatpush1.msra.mxu0 0.0
    %1697 = vmatprep.subr.mxu0 0.0
    %1698 = vmatpush1.msra.mxu0 0.0
    %1699 = vmatprep.subr.mxu0 0.0
    %1700 = vmatpush1.msra.mxu0 0.0
    %1701 = vmatprep.subr.mxu0 0.0
    %1702 = vmatpush1.msra.mxu0 0.0
    %1703 = vmatprep.subr.mxu0 0.0
    %1704 = vmatpush1.msra.mxu0 0.0
    %1705 = vmatprep.subr.mxu0 0.0
    %1706 = vmatpush1.msra.mxu0 0.0
    %1707 = vmatprep.subr.mxu0 0.0
    %1708 = vmatpush1.msra.mxu0 0.0
    %1709 = vmatprep.subr.mxu0 0.0
    %1710 = vmatpush1.msra.mxu0 0.0
    %1711 = vmatprep.mubr.f32.mxu0 0.0
    %1712 = vmatmul.mubr.f32.gmra.mrb[0].mxu0 %v294
    %v1713 = vpop.f32.mrb[0].mxu0
    %v1714 = vadd.f32 %v1645, %v1713
    %v1715 = vpop.f32.mrb[0].mxu0
    %1716 = vdwg.mxu0
    %v1717 = vmul.f32 %v1714, %v33
    %v1718 = vsel %vm367, %v1717, 0.0
    %1719 = vadd.xlane.f32.xlu0 %v1718
    %v1720 = vpop.xlane.xlu0 %1719
    %vm1721 = vcmp.eq.s32.totalorder %v280, 15
    %v1722 = vsel %vm1721, %v1720, 0.0
    %v1723 = vadd.f32 %v1633, %v1722
    %v1724 = vmul.f32 %v1723, %v1723
    %v1725 = vsel %vm367, %v1724, 0.0
    %1726 = vadd.xlane.f32.xlu0 %v1725
    %v1727 = vpop.xlane.xlu0 %1726
    %v1728 = vmax.f32 %v1727, 1e-24
    %v1729 = vrsqrt.pop %v1728
    %v1730 = vmul.f32 %v1723, %v1729
    %1731 = vst.msk [vmem:[#allocation2] sm:$0x3] %vm367, %v1730
    // Predicated region
    $region38: #{tpu_custom_call.1} parent=1 // pred_check
      _
    $region39: #{tpu_custom_call.1} parent=1 // pred_check_branch
      %1733 = sbr.rel (0) target = $region41
    $region40: #{tpu_custom_call.1} parent=1 // pred_region
      %s1735 = ssub.s32 32, 32
      %1736 = vsyncadd [#allocation3], %s1735
      %s1738 = sshll.u32 [#allocation2], 4
      %s1739 = int_to_ptr.vmem [resolvable:$true] %s1738
      %1741 = dma.vmem_to_hbm [thread:$0]  %s1739, 32, %s9, [#allocation3]
    $region41: #{tpu_custom_call.1} parent=1 // pred_fallthru
      _
    // Predicated region
    $region42: #{tpu_custom_call.1} parent=1 // pred_check
      _
    $region43: #{tpu_custom_call.1} parent=1 // pred_check_branch
      %1743 = sbr.rel (0) target = $region45
    $region44: #{tpu_custom_call.1} parent=1 // pred_region
      %1744 = dma.done [#allocation3], 32
    $region45: #{tpu_custom_call.1} parent=1 // pred_fallthru
      _
    %1745 = vsyncpa [#allocation3], 1

</llo_original>
